<compile_context>
chip_gen: v7x
topology: tpu7x:2x2x1
jax: 0.10.0
libtpu: 0.0.40
codegen_flags: <defaults>
</compile_context>

<pallas_src>
import jax
import jax.numpy as jnp
from jax.experimental import pallas as pl
from jax.experimental.pallas import tpu as pltpu

NUM_FILTERS = 10       # MNN(1, 10, 28) -> 10 morphological filters
IMG = 28               # kernel size == image size -> 1x1 spatial output
NUM_CLASSES = 2
LANE = 128
NEG_PAD = -1e30        # neutral pad so padded lanes never win max/min
OUT_W = LANE           # packed output slab width (lane-dense)
TILE_CAP = 512         # batch-tile cap (safe on v5e's 16 MiB scoped VMEM)


def _cdiv(a, b):
    return (a + b - 1) // b


def _round_up(x, m):
    return _cdiv(x, m) * m


def _tile_n(n):
    """Adaptive batch tile: multiple of 8, <= TILE_CAP, minimal batch padding,
    and >= 2 grid steps whenever possible (so v7x's 2nd TensorCore gets work)."""
    n = max(n, 1)
    n_tiles = _cdiv(n, TILE_CAP)
    if n > 8:
        n_tiles = max(n_tiles, 2)
    return max(_round_up(_cdiv(n, n_tiles), 8), 8)


# ----------------------------- Pallas kernels ------------------------------

def fused_cls_kernel(x_ref, kh_ref, km_ref, wt_ref, b_ref, out_ref):
    """Encoder + head fused.  x:(TN,PP) kh/km:(F,PP) wt:(C,F) b:(1,C)
    out:(TN,128) = [emb | hit | miss | log_probs | zeros]."""
    f_dim, c_dim = NUM_FILTERS, NUM_CLASSES
    out_ref[...] = jnp.zeros_like(out_ref)          # deterministic pad lanes

    emb_cols = []
    for f in range(f_dim):
        x = x_ref[...]                               # streamed per filter
        kh_row = kh_ref[f:f + 1, :]                  # (1, PP)
        km_row = km_ref[f:f + 1, :]                  # (1, PP)
        hit_f = jnp.max(x + kh_row, axis=-1, keepdims=True)    # (TN, 1)
        miss_f = jnp.min(x - km_row, axis=-1, keepdims=True)   # (TN, 1)
        emb_f = hit_f - miss_f
        # column packing via partial stores (idle vst slot) instead of
        # lane-concatenating width-1 columns on the saturated VALU/XLU.
        out_ref[:, f:f + 1] = emb_f
        out_ref[:, f_dim + f:f_dim + f + 1] = hit_f
        out_ref[:, 2 * f_dim + f:2 * f_dim + f + 1] = miss_f
        emb_cols.append(emb_f)

    emb = jnp.concatenate(emb_cols, axis=-1)         # (TN, F) — tiny, for head

    # LeakyReLU (default negative_slope = 0.01)
    a = jnp.where(emb > 0, emb, 0.01 * emb)

    # 10x2 linear on the VPU (MXU would be >98% padding at these sizes).
    logit_cols = []
    for c in range(c_dim):
        w_row = wt_ref[c:c + 1, :]                   # (1, F)
        logit_cols.append(jnp.sum(a * w_row, axis=-1, keepdims=True))
    logits = jnp.concatenate(logit_cols, axis=-1) + b_ref[...]   # (TN, C)

    # log_softmax over the class dimension
    m = jnp.max(logits, axis=-1, keepdims=True)
    z = logits - m
    logp = z - jnp.log(jnp.sum(jnp.exp(z), axis=-1, keepdims=True))
    out_ref[:, 3 * f_dim:3 * f_dim + c_dim] = logp


def encode_kernel(x_ref, kh_ref, km_ref, out_ref):
    """Encoder only (fused triplet path).  out:(TN,128) = [emb | zeros]."""
    out_ref[...] = jnp.zeros_like(out_ref)
    for f in range(NUM_FILTERS):
        x = x_ref[...]                               # streamed per filter
        hit_f = jnp.max(x + kh_ref[f:f + 1, :], axis=-1, keepdims=True)
        miss_f = jnp.min(x - km_ref[f:f + 1, :], axis=-1, keepdims=True)
        out_ref[:, f:f + 1] = hit_f - miss_f


# ------------------------------ JAX wrappers --------------------------------

def _pad_inputs(x2d, k_hit, k_miss, tile_n):
    """Zero-pad x (batch + lanes), NEG_PAD-pad the filters along lanes."""
    n, p = x2d.shape
    f = k_hit.shape[0]
    pp = _round_up(p, LANE)
    np_ = _round_up(max(n, 1), tile_n)
    x2d = jnp.pad(x2d.astype(jnp.float32), ((0, np_ - n), (0, pp - p)))
    kh = jnp.pad(k_hit.reshape(f, p).astype(jnp.float32),
                 ((0, 0), (0, pp - p)), constant_values=NEG_PAD)
    km = jnp.pad(k_miss.reshape(f, p).astype(jnp.float32),
                 ((0, 0), (0, pp - p)), constant_values=NEG_PAD)
    return x2d, kh, km, np_, pp


def morph_forward_cls(params, anchor):
    """Classification path: returns (log_probs, embedding, hit, miss)."""
    k_hit, k_miss, w, b = params
    n = anchor.shape[0]
    f, c = NUM_FILTERS, NUM_CLASSES
    tn = _tile_n(n)
    x2d = anchor.reshape(n, -1)
    x2d, kh, km, np_, pp = _pad_inputs(x2d, k_hit, k_miss, tn)
    wt = jnp.transpose(w).astype(jnp.float32)          # (C, F)
    b2 = b.reshape(1, c).astype(jnp.float32)           # (1, C)

    packed = pl.pallas_call(
        fused_cls_kernel,
        grid=(np_ // tn,),
        in_specs=[
            pl.BlockSpec((tn, pp), lambda i: (i, 0)),
            pl.BlockSpec((f, pp), lambda i: (0, 0)),
            pl.BlockSpec((f, pp), lambda i: (0, 0)),
            pl.BlockSpec((c, f), lambda i: (0, 0)),
            pl.BlockSpec((1, c), lambda i: (0, 0)),
        ],
        out_specs=pl.BlockSpec((tn, OUT_W), lambda i: (i, 0)),
        out_shape=jax.ShapeDtypeStruct((np_, OUT_W), jnp.float32),
        compiler_params=pltpu.CompilerParams(
            dimension_semantics=("parallel",)),
    )(x2d, kh, km, wt, b2)

    packed = packed[:n]
    emb = packed[:, :f]
    hit = packed[:, f:2 * f].reshape(n, f, 1, 1)
    miss = packed[:, 2 * f:3 * f].reshape(n, f, 1, 1)
    log_probs = packed[:, 3 * f:3 * f + c]
    return log_probs, emb, hit, miss


def morph_encode_emb(k_hit, k_miss, x2d):
    """Encoder on a flattened (N, P) batch: returns the (N, F) embedding."""
    n = x2d.shape[0]
    f = NUM_FILTERS
    tn = _tile_n(n)
    x2d, kh, km, np_, pp = _pad_inputs(x2d, k_hit, k_miss, tn)

    packed = pl.pallas_call(
        encode_kernel,
        grid=(np_ // tn,),
        in_specs=[
            pl.BlockSpec((tn, pp), lambda i: (i, 0)),
            pl.BlockSpec((f, pp), lambda i: (0, 0)),
            pl.BlockSpec((f, pp), lambda i: (0, 0)),
        ],
        out_specs=pl.BlockSpec((tn, OUT_W), lambda i: (i, 0)),
        out_shape=jax.ShapeDtypeStruct((np_, OUT_W), jnp.float32),
        compiler_params=pltpu.CompilerParams(
            dimension_semantics=("parallel",)),
    )(x2d, kh, km)
    return packed[:n, :f]


def morph_triplet_model(params, anchor, positive=None, negative=None):
    """Mirrors MorphTripletModel.forward."""
    k_hit, k_miss, w, b = params
    if positive is None or negative is None:
        return morph_forward_cls(params, anchor)
    # Fused triplet path: one pallas_call over [anchor; positive; negative].
    xs = [v.reshape(v.shape[0], -1) for v in (anchor, positive, negative)]
    ns = [v.shape[0] for v in xs]
    emb_all = morph_encode_emb(k_hit, k_miss, jnp.concatenate(xs, axis=0))
    o1 = ns[0]
    o2 = o1 + ns[1]
    o3 = o2 + ns[2]
    return emb_all[:o1], emb_all[o1:o2], emb_all[o2:o3]


# --------------------------- reference (pure JAX) ----------------------------

def _forward_ref(params, x_nchw):
    k_hit, k_miss, w, b = params
    n = x_nchw.shape[0]
    f = k_hit.shape[0]
    x = x_nchw.reshape(n, -1)
    kh = k_hit.reshape(f, -1)
    km = k_miss.reshape(f, -1)
    hit = jnp.max(x[:, None, :] + kh[None], axis=-1)
    miss = jnp.min(x[:, None, :] - km[None], axis=-1)
    emb = hit - miss
    a = jnp.where(emb > 0, emb, 0.01 * emb)
    logits = a @ w + b
    logp = logits - jax.scipy.special.logsumexp(logits, axis=1, keepdims=True)
    return logp, emb, hit, miss


# ----------------------------------- main ------------------------------------

if __name__ == "__main__":
    key = jax.random.PRNGKey(0)
    k1, k2, k3, k4, k5, k6, k7 = jax.random.split(key, 7)

    # deterministic synthetic parameters
    k_hit = 0.1 * jax.random.normal(k1, (NUM_FILTERS, 1, IMG, IMG), jnp.float32)
    k_miss = 0.1 * jax.random.normal(k2, (NUM_FILTERS, 1, IMG, IMG), jnp.float32)
    w_fc = 0.1 * jax.random.normal(k3, (NUM_FILTERS, NUM_CLASSES), jnp.float32)
    b_fc = 0.1 * jax.random.normal(k4, (NUM_CLASSES,), jnp.float32)
    params = (k_hit, k_miss, w_fc, b_fc)

    # small MNIST-like inputs (batch=2, NCHW)
    anchor = jax.random.normal(k5, (2, 1, IMG, IMG), jnp.float32)
    positive = jax.random.normal(k6, (2, 1, IMG, IMG), jnp.float32)
    negative = jax.random.normal(k7, (2, 1, IMG, IMG), jnp.float32)

    # classification path: (log_probs, emb, hit, miss)
    log_probs, emb, hit, miss = morph_triplet_model(params, anchor)
    jax.block_until_ready((log_probs, emb, hit, miss))

    # triplet path: three embeddings (one fused pallas_call)
    anc_e, pos_e, neg_e = morph_triplet_model(params, anchor, positive, negative)
    jax.block_until_ready((anc_e, pos_e, neg_e))

    # sanity-check against a pure-JAX reference
    logp_ref, emb_ref, hit_ref, miss_ref = _forward_ref(params, anchor)
    assert jnp.allclose(emb, emb_ref, atol=1e-5)
    assert jnp.allclose(hit.reshape(hit_ref.shape), hit_ref, atol=1e-5)
    assert jnp.allclose(miss.reshape(miss_ref.shape), miss_ref, atol=1e-5)
    assert jnp.allclose(log_probs, logp_ref, atol=1e-5)
    assert jnp.allclose(anc_e, emb_ref, atol=1e-5)
    _, pos_ref, *_ = _forward_ref(params, positive)
    _, neg_ref, *_ = _forward_ref(params, negative)
    assert jnp.allclose(pos_e, pos_ref, atol=1e-5)
    assert jnp.allclose(neg_e, neg_ref, atol=1e-5)
    assert log_probs.shape == (2, NUM_CLASSES)
    assert anc_e.shape == (2, NUM_FILTERS)

    print("KERNEL_OK")
</pallas_src>

<mosaic_0001>
module attributes {stable_mosaic.version = 11 : i64} {
  func.func @fused_cls_kernel(%arg0: i32, %arg1: memref<8x896xf32, #tpu.memory_space<vmem>>, %arg2: memref<10x896xf32, #tpu.memory_space<vmem>>, %arg3: memref<10x896xf32, #tpu.memory_space<vmem>>, %arg4: memref<2x10xf32, #tpu.memory_space<vmem>>, %arg5: memref<1x2xf32, #tpu.memory_space<vmem>>, %arg6: memref<8x128xf32, #tpu.memory_space<vmem>>) attributes {dimension_semantics = [#tpu.dimension_semantics<parallel>], iteration_bounds = array<i64: 1>, scalar_prefetch = 0 : i64, scratch_operands = 0 : i64, tpu.core_type = #tpu.core_type<tc>, window_params = [{transform_indices = @transform_0, window_bounds = array<i64: 8, 896>}, {pipeline_mode = #tpu.pipeline_mode<synchronous>, transform_indices = @transform_1, window_bounds = array<i64: 10, 896>}, {pipeline_mode = #tpu.pipeline_mode<synchronous>, transform_indices = @transform_2, window_bounds = array<i64: 10, 896>}, {pipeline_mode = #tpu.pipeline_mode<synchronous>, transform_indices = @transform_3, window_bounds = array<i64: 2, 10>}, {pipeline_mode = #tpu.pipeline_mode<synchronous>, transform_indices = @transform_4, window_bounds = array<i64: 1, 2>}, {transform_indices = @transform_5, window_bounds = array<i64: 8, 128>}]} {
    %cst = arith.constant 0.000000e+00 : f32
    %0 = vector.broadcast %cst : f32 to vector<8x128xf32>
    %c0 = arith.constant 0 : index
    %c0_0 = arith.constant 0 : index
    %1 = vector.load %arg6[%c0, %c0_0] : memref<8x128xf32, #tpu.memory_space<vmem>>, vector<8x128xf32>
    tpu.vector_store %arg6[%c0, %c0_0], %0 {strides = array<i32>} : memref<8x128xf32, #tpu.memory_space<vmem>>, vector<8x128xf32>,
    %c0_1 = arith.constant 0 : index
    %c0_2 = arith.constant 0 : index
    %2 = vector.load %arg1[%c0_1, %c0_2] : memref<8x896xf32, #tpu.memory_space<vmem>>, vector<8x896xf32>
    %c0_3 = arith.constant 0 : index
    %c0_4 = arith.constant 0 : index
    %3 = vector.load %arg2[%c0_3, %c0_4] : memref<10x896xf32, #tpu.memory_space<vmem>>, vector<1x896xf32>
    %c0_5 = arith.constant 0 : index
    %c0_6 = arith.constant 0 : index
    %4 = vector.load %arg3[%c0_5, %c0_6] : memref<10x896xf32, #tpu.memory_space<vmem>>, vector<1x896xf32>
    %5 = vector.broadcast %3 : vector<1x896xf32> to vector<8x896xf32>
    %6 = arith.addf %2, %5 : vector<8x896xf32>
    %cst_7 = arith.constant dense<0xFF800000> : vector<8xf32>
    %7 = vector.multi_reduction <maximumf>, %6, %cst_7 [1] : vector<8x896xf32> to vector<8xf32>
    %8 = vector.shape_cast %7 : vector<8xf32> to vector<8x1xf32>
    %9 = vector.broadcast %4 : vector<1x896xf32> to vector<8x896xf32>
    %10 = arith.subf %2, %9 : vector<8x896xf32>
    %cst_8 = arith.constant dense<0x7F800000> : vector<8xf32>
    %11 = vector.multi_reduction <minimumf>, %10, %cst_8 [1] : vector<8x896xf32> to vector<8xf32>
    %12 = vector.shape_cast %11 : vector<8xf32> to vector<8x1xf32>
    %13 = arith.subf %8, %12 : vector<8x1xf32>
    %c0_9 = arith.constant 0 : index
    %c0_10 = arith.constant 0 : index
    %14 = vector.load %arg6[%c0_9, %c0_10] : memref<8x128xf32, #tpu.memory_space<vmem>>, vector<8x1xf32>
    tpu.vector_store %arg6[%c0_9, %c0_10], %13 {strides = array<i32>} : memref<8x128xf32, #tpu.memory_space<vmem>>, vector<8x1xf32>,
    %c0_11 = arith.constant 0 : index
    %c10 = arith.constant 10 : index
    %15 = vector.load %arg6[%c0_11, %c10] : memref<8x128xf32, #tpu.memory_space<vmem>>, vector<8x1xf32>
    tpu.vector_store %arg6[%c0_11, %c10], %8 {strides = array<i32>} : memref<8x128xf32, #tpu.memory_space<vmem>>, vector<8x1xf32>,
    %c0_12 = arith.constant 0 : index
    %c20 = arith.constant 20 : index
    %16 = vector.load %arg6[%c0_12, %c20] : memref<8x128xf32, #tpu.memory_space<vmem>>, vector<8x1xf32>
    tpu.vector_store %arg6[%c0_12, %c20], %12 {strides = array<i32>} : memref<8x128xf32, #tpu.memory_space<vmem>>, vector<8x1xf32>,
    %c0_13 = arith.constant 0 : index
    %c0_14 = arith.constant 0 : index
    %17 = vector.load %arg1[%c0_13, %c0_14] : memref<8x896xf32, #tpu.memory_space<vmem>>, vector<8x896xf32>
    %c1 = arith.constant 1 : index
    %c0_15 = arith.constant 0 : index
    %18 = vector.load %arg2[%c1, %c0_15] : memref<10x896xf32, #tpu.memory_space<vmem>>, vector<1x896xf32>
    %c1_16 = arith.constant 1 : index
    %c0_17 = arith.constant 0 : index
    %19 = vector.load %arg3[%c1_16, %c0_17] : memref<10x896xf32, #tpu.memory_space<vmem>>, vector<1x896xf32>
    %20 = vector.broadcast %18 : vector<1x896xf32> to vector<8x896xf32>
    %21 = arith.addf %17, %20 : vector<8x896xf32>
    %cst_18 = arith.constant dense<0xFF800000> : vector<8xf32>
    %22 = vector.multi_reduction <maximumf>, %21, %cst_18 [1] : vector<8x896xf32> to vector<8xf32>
    %23 = vector.shape_cast %22 : vector<8xf32> to vector<8x1xf32>
    %24 = vector.broadcast %19 : vector<1x896xf32> to vector<8x896xf32>
    %25 = arith.subf %17, %24 : vector<8x896xf32>
    %cst_19 = arith.constant dense<0x7F800000> : vector<8xf32>
    %26 = vector.multi_reduction <minimumf>, %25, %cst_19 [1] : vector<8x896xf32> to vector<8xf32>
    %27 = vector.shape_cast %26 : vector<8xf32> to vector<8x1xf32>
    %28 = arith.subf %23, %27 : vector<8x1xf32>
    %c0_20 = arith.constant 0 : index
    %c1_21 = arith.constant 1 : index
    %29 = vector.load %arg6[%c0_20, %c1_21] : memref<8x128xf32, #tpu.memory_space<vmem>>, vector<8x1xf32>
    tpu.vector_store %arg6[%c0_20, %c1_21], %28 {strides = array<i32>} : memref<8x128xf32, #tpu.memory_space<vmem>>, vector<8x1xf32>,
    %c0_22 = arith.constant 0 : index
    %c11 = arith.constant 11 : index
    %30 = vector.load %arg6[%c0_22, %c11] : memref<8x128xf32, #tpu.memory_space<vmem>>, vector<8x1xf32>
    tpu.vector_store %arg6[%c0_22, %c11], %23 {strides = array<i32>} : memref<8x128xf32, #tpu.memory_space<vmem>>, vector<8x1xf32>,
    %c0_23 = arith.constant 0 : index
    %c21 = arith.constant 21 : index
    %31 = vector.load %arg6[%c0_23, %c21] : memref<8x128xf32, #tpu.memory_space<vmem>>, vector<8x1xf32>
    tpu.vector_store %arg6[%c0_23, %c21], %27 {strides = array<i32>} : memref<8x128xf32, #tpu.memory_space<vmem>>, vector<8x1xf32>,
    %c0_24 = arith.constant 0 : index
    %c0_25 = arith.constant 0 : index
    %32 = vector.load %arg1[%c0_24, %c0_25] : memref<8x896xf32, #tpu.memory_space<vmem>>, vector<8x896xf32>
    %c2 = arith.constant 2 : index
    %c0_26 = arith.constant 0 : index
    %33 = vector.load %arg2[%c2, %c0_26] : memref<10x896xf32, #tpu.memory_space<vmem>>, vector<1x896xf32>
    %c2_27 = arith.constant 2 : index
    %c0_28 = arith.constant 0 : index
    %34 = vector.load %arg3[%c2_27, %c0_28] : memref<10x896xf32, #tpu.memory_space<vmem>>, vector<1x896xf32>
    %35 = vector.broadcast %33 : vector<1x896xf32> to vector<8x896xf32>
    %36 = arith.addf %32, %35 : vector<8x896xf32>
    %cst_29 = arith.constant dense<0xFF800000> : vector<8xf32>
    %37 = vector.multi_reduction <maximumf>, %36, %cst_29 [1] : vector<8x896xf32> to vector<8xf32>
    %38 = vector.shape_cast %37 : vector<8xf32> to vector<8x1xf32>
    %39 = vector.broadcast %34 : vector<1x896xf32> to vector<8x896xf32>
    %40 = arith.subf %32, %39 : vector<8x896xf32>
    %cst_30 = arith.constant dense<0x7F800000> : vector<8xf32>
    %41 = vector.multi_reduction <minimumf>, %40, %cst_30 [1] : vector<8x896xf32> to vector<8xf32>
    %42 = vector.shape_cast %41 : vector<8xf32> to vector<8x1xf32>
    %43 = arith.subf %38, %42 : vector<8x1xf32>
    %c0_31 = arith.constant 0 : index
    %c2_32 = arith.constant 2 : index
    %44 = vector.load %arg6[%c0_31, %c2_32] : memref<8x128xf32, #tpu.memory_space<vmem>>, vector<8x1xf32>
    tpu.vector_store %arg6[%c0_31, %c2_32], %43 {strides = array<i32>} : memref<8x128xf32, #tpu.memory_space<vmem>>, vector<8x1xf32>,
    %c0_33 = arith.constant 0 : index
    %c12 = arith.constant 12 : index
    %45 = vector.load %arg6[%c0_33, %c12] : memref<8x128xf32, #tpu.memory_space<vmem>>, vector<8x1xf32>
    tpu.vector_store %arg6[%c0_33, %c12], %38 {strides = array<i32>} : memref<8x128xf32, #tpu.memory_space<vmem>>, vector<8x1xf32>,
    %c0_34 = arith.constant 0 : index
    %c22 = arith.constant 22 : index
    %46 = vector.load %arg6[%c0_34, %c22] : memref<8x128xf32, #tpu.memory_space<vmem>>, vector<8x1xf32>
    tpu.vector_store %arg6[%c0_34, %c22], %42 {strides = array<i32>} : memref<8x128xf32, #tpu.memory_space<vmem>>, vector<8x1xf32>,
    %c0_35 = arith.constant 0 : index
    %c0_36 = arith.constant 0 : index
    %47 = vector.load %arg1[%c0_35, %c0_36] : memref<8x896xf32, #tpu.memory_space<vmem>>, vector<8x896xf32>
    %c3 = arith.constant 3 : index
    %c0_37 = arith.constant 0 : index
    %48 = vector.load %arg2[%c3, %c0_37] : memref<10x896xf32, #tpu.memory_space<vmem>>, vector<1x896xf32>
    %c3_38 = arith.constant 3 : index
    %c0_39 = arith.constant 0 : index
    %49 = vector.load %arg3[%c3_38, %c0_39] : memref<10x896xf32, #tpu.memory_space<vmem>>, vector<1x896xf32>
    %50 = vector.broadcast %48 : vector<1x896xf32> to vector<8x896xf32>
    %51 = arith.addf %47, %50 : vector<8x896xf32>
    %cst_40 = arith.constant dense<0xFF800000> : vector<8xf32>
    %52 = vector.multi_reduction <maximumf>, %51, %cst_40 [1] : vector<8x896xf32> to vector<8xf32>
    %53 = vector.shape_cast %52 : vector<8xf32> to vector<8x1xf32>
    %54 = vector.broadcast %49 : vector<1x896xf32> to vector<8x896xf32>
    %55 = arith.subf %47, %54 : vector<8x896xf32>
    %cst_41 = arith.constant dense<0x7F800000> : vector<8xf32>
    %56 = vector.multi_reduction <minimumf>, %55, %cst_41 [1] : vector<8x896xf32> to vector<8xf32>
    %57 = vector.shape_cast %56 : vector<8xf32> to vector<8x1xf32>
    %58 = arith.subf %53, %57 : vector<8x1xf32>
    %c0_42 = arith.constant 0 : index
    %c3_43 = arith.constant 3 : index
    %59 = vector.load %arg6[%c0_42, %c3_43] : memref<8x128xf32, #tpu.memory_space<vmem>>, vector<8x1xf32>
    tpu.vector_store %arg6[%c0_42, %c3_43], %58 {strides = array<i32>} : memref<8x128xf32, #tpu.memory_space<vmem>>, vector<8x1xf32>,
    %c0_44 = arith.constant 0 : index
    %c13 = arith.constant 13 : index
    %60 = vector.load %arg6[%c0_44, %c13] : memref<8x128xf32, #tpu.memory_space<vmem>>, vector<8x1xf32>
    tpu.vector_store %arg6[%c0_44, %c13], %53 {strides = array<i32>} : memref<8x128xf32, #tpu.memory_space<vmem>>, vector<8x1xf32>,
    %c0_45 = arith.constant 0 : index
    %c23 = arith.constant 23 : index
    %61 = vector.load %arg6[%c0_45, %c23] : memref<8x128xf32, #tpu.memory_space<vmem>>, vector<8x1xf32>
    tpu.vector_store %arg6[%c0_45, %c23], %57 {strides = array<i32>} : memref<8x128xf32, #tpu.memory_space<vmem>>, vector<8x1xf32>,
    %c0_46 = arith.constant 0 : index
    %c0_47 = arith.constant 0 : index
    %62 = vector.load %arg1[%c0_46, %c0_47] : memref<8x896xf32, #tpu.memory_space<vmem>>, vector<8x896xf32>
    %c4 = arith.constant 4 : index
    %c0_48 = arith.constant 0 : index
    %63 = vector.load %arg2[%c4, %c0_48] : memref<10x896xf32, #tpu.memory_space<vmem>>, vector<1x896xf32>
    %c4_49 = arith.constant 4 : index
    %c0_50 = arith.constant 0 : index
    %64 = vector.load %arg3[%c4_49, %c0_50] : memref<10x896xf32, #tpu.memory_space<vmem>>, vector<1x896xf32>
    %65 = vector.broadcast %63 : vector<1x896xf32> to vector<8x896xf32>
    %66 = arith.addf %62, %65 : vector<8x896xf32>
    %cst_51 = arith.constant dense<0xFF800000> : vector<8xf32>
    %67 = vector.multi_reduction <maximumf>, %66, %cst_51 [1] : vector<8x896xf32> to vector<8xf32>
    %68 = vector.shape_cast %67 : vector<8xf32> to vector<8x1xf32>
    %69 = vector.broadcast %64 : vector<1x896xf32> to vector<8x896xf32>
    %70 = arith.subf %62, %69 : vector<8x896xf32>
    %cst_52 = arith.constant dense<0x7F800000> : vector<8xf32>
    %71 = vector.multi_reduction <minimumf>, %70, %cst_52 [1] : vector<8x896xf32> to vector<8xf32>
    %72 = vector.shape_cast %71 : vector<8xf32> to vector<8x1xf32>
    %73 = arith.subf %68, %72 : vector<8x1xf32>
    %c0_53 = arith.constant 0 : index
    %c4_54 = arith.constant 4 : index
    %74 = vector.load %arg6[%c0_53, %c4_54] : memref<8x128xf32, #tpu.memory_space<vmem>>, vector<8x1xf32>
    tpu.vector_store %arg6[%c0_53, %c4_54], %73 {strides = array<i32>} : memref<8x128xf32, #tpu.memory_space<vmem>>, vector<8x1xf32>,
    %c0_55 = arith.constant 0 : index
    %c14 = arith.constant 14 : index
    %75 = vector.load %arg6[%c0_55, %c14] : memref<8x128xf32, #tpu.memory_space<vmem>>, vector<8x1xf32>
    tpu.vector_store %arg6[%c0_55, %c14], %68 {strides = array<i32>} : memref<8x128xf32, #tpu.memory_space<vmem>>, vector<8x1xf32>,
    %c0_56 = arith.constant 0 : index
    %c24 = arith.constant 24 : index
    %76 = vector.load %arg6[%c0_56, %c24] : memref<8x128xf32, #tpu.memory_space<vmem>>, vector<8x1xf32>
    tpu.vector_store %arg6[%c0_56, %c24], %72 {strides = array<i32>} : memref<8x128xf32, #tpu.memory_space<vmem>>, vector<8x1xf32>,
    %c0_57 = arith.constant 0 : index
    %c0_58 = arith.constant 0 : index
    %77 = vector.load %arg1[%c0_57, %c0_58] : memref<8x896xf32, #tpu.memory_space<vmem>>, vector<8x896xf32>
    %c5 = arith.constant 5 : index
    %c0_59 = arith.constant 0 : index
    %78 = vector.load %arg2[%c5, %c0_59] : memref<10x896xf32, #tpu.memory_space<vmem>>, vector<1x896xf32>
    %c5_60 = arith.constant 5 : index
    %c0_61 = arith.constant 0 : index
    %79 = vector.load %arg3[%c5_60, %c0_61] : memref<10x896xf32, #tpu.memory_space<vmem>>, vector<1x896xf32>
    %80 = vector.broadcast %78 : vector<1x896xf32> to vector<8x896xf32>
    %81 = arith.addf %77, %80 : vector<8x896xf32>
    %cst_62 = arith.constant dense<0xFF800000> : vector<8xf32>
    %82 = vector.multi_reduction <maximumf>, %81, %cst_62 [1] : vector<8x896xf32> to vector<8xf32>
    %83 = vector.shape_cast %82 : vector<8xf32> to vector<8x1xf32>
    %84 = vector.broadcast %79 : vector<1x896xf32> to vector<8x896xf32>
    %85 = arith.subf %77, %84 : vector<8x896xf32>
    %cst_63 = arith.constant dense<0x7F800000> : vector<8xf32>
    %86 = vector.multi_reduction <minimumf>, %85, %cst_63 [1] : vector<8x896xf32> to vector<8xf32>
    %87 = vector.shape_cast %86 : vector<8xf32> to vector<8x1xf32>
    %88 = arith.subf %83, %87 : vector<8x1xf32>
    %c0_64 = arith.constant 0 : index
    %c5_65 = arith.constant 5 : index
    %89 = vector.load %arg6[%c0_64, %c5_65] : memref<8x128xf32, #tpu.memory_space<vmem>>, vector<8x1xf32>
    tpu.vector_store %arg6[%c0_64, %c5_65], %88 {strides = array<i32>} : memref<8x128xf32, #tpu.memory_space<vmem>>, vector<8x1xf32>,
    %c0_66 = arith.constant 0 : index
    %c15 = arith.constant 15 : index
    %90 = vector.load %arg6[%c0_66, %c15] : memref<8x128xf32, #tpu.memory_space<vmem>>, vector<8x1xf32>
    tpu.vector_store %arg6[%c0_66, %c15], %83 {strides = array<i32>} : memref<8x128xf32, #tpu.memory_space<vmem>>, vector<8x1xf32>,
    %c0_67 = arith.constant 0 : index
    %c25 = arith.constant 25 : index
    %91 = vector.load %arg6[%c0_67, %c25] : memref<8x128xf32, #tpu.memory_space<vmem>>, vector<8x1xf32>
    tpu.vector_store %arg6[%c0_67, %c25], %87 {strides = array<i32>} : memref<8x128xf32, #tpu.memory_space<vmem>>, vector<8x1xf32>,
    %c0_68 = arith.constant 0 : index
    %c0_69 = arith.constant 0 : index
    %92 = vector.load %arg1[%c0_68, %c0_69] : memref<8x896xf32, #tpu.memory_space<vmem>>, vector<8x896xf32>
    %c6 = arith.constant 6 : index
    %c0_70 = arith.constant 0 : index
    %93 = vector.load %arg2[%c6, %c0_70] : memref<10x896xf32, #tpu.memory_space<vmem>>, vector<1x896xf32>
    %c6_71 = arith.constant 6 : index
    %c0_72 = arith.constant 0 : index
    %94 = vector.load %arg3[%c6_71, %c0_72] : memref<10x896xf32, #tpu.memory_space<vmem>>, vector<1x896xf32>
    %95 = vector.broadcast %93 : vector<1x896xf32> to vector<8x896xf32>
    %96 = arith.addf %92, %95 : vector<8x896xf32>
    %cst_73 = arith.constant dense<0xFF800000> : vector<8xf32>
    %97 = vector.multi_reduction <maximumf>, %96, %cst_73 [1] : vector<8x896xf32> to vector<8xf32>
    %98 = vector.shape_cast %97 : vector<8xf32> to vector<8x1xf32>
    %99 = vector.broadcast %94 : vector<1x896xf32> to vector<8x896xf32>
    %100 = arith.subf %92, %99 : vector<8x896xf32>
    %cst_74 = arith.constant dense<0x7F800000> : vector<8xf32>
    %101 = vector.multi_reduction <minimumf>, %100, %cst_74 [1] : vector<8x896xf32> to vector<8xf32>
    %102 = vector.shape_cast %101 : vector<8xf32> to vector<8x1xf32>
    %103 = arith.subf %98, %102 : vector<8x1xf32>
    %c0_75 = arith.constant 0 : index
    %c6_76 = arith.constant 6 : index
    %104 = vector.load %arg6[%c0_75, %c6_76] : memref<8x128xf32, #tpu.memory_space<vmem>>, vector<8x1xf32>
    tpu.vector_store %arg6[%c0_75, %c6_76], %103 {strides = array<i32>} : memref<8x128xf32, #tpu.memory_space<vmem>>, vector<8x1xf32>,
    %c0_77 = arith.constant 0 : index
    %c16 = arith.constant 16 : index
    %105 = vector.load %arg6[%c0_77, %c16] : memref<8x128xf32, #tpu.memory_space<vmem>>, vector<8x1xf32>
    tpu.vector_store %arg6[%c0_77, %c16], %98 {strides = array<i32>} : memref<8x128xf32, #tpu.memory_space<vmem>>, vector<8x1xf32>,
    %c0_78 = arith.constant 0 : index
    %c26 = arith.constant 26 : index
    %106 = vector.load %arg6[%c0_78, %c26] : memref<8x128xf32, #tpu.memory_space<vmem>>, vector<8x1xf32>
    tpu.vector_store %arg6[%c0_78, %c26], %102 {strides = array<i32>} : memref<8x128xf32, #tpu.memory_space<vmem>>, vector<8x1xf32>,
    %c0_79 = arith.constant 0 : index
    %c0_80 = arith.constant 0 : index
    %107 = vector.load %arg1[%c0_79, %c0_80] : memref<8x896xf32, #tpu.memory_space<vmem>>, vector<8x896xf32>
    %c7 = arith.constant 7 : index
    %c0_81 = arith.constant 0 : index
    %108 = vector.load %arg2[%c7, %c0_81] : memref<10x896xf32, #tpu.memory_space<vmem>>, vector<1x896xf32>
    %c7_82 = arith.constant 7 : index
    %c0_83 = arith.constant 0 : index
    %109 = vector.load %arg3[%c7_82, %c0_83] : memref<10x896xf32, #tpu.memory_space<vmem>>, vector<1x896xf32>
    %110 = vector.broadcast %108 : vector<1x896xf32> to vector<8x896xf32>
    %111 = arith.addf %107, %110 : vector<8x896xf32>
    %cst_84 = arith.constant dense<0xFF800000> : vector<8xf32>
    %112 = vector.multi_reduction <maximumf>, %111, %cst_84 [1] : vector<8x896xf32> to vector<8xf32>
    %113 = vector.shape_cast %112 : vector<8xf32> to vector<8x1xf32>
    %114 = vector.broadcast %109 : vector<1x896xf32> to vector<8x896xf32>
    %115 = arith.subf %107, %114 : vector<8x896xf32>
    %cst_85 = arith.constant dense<0x7F800000> : vector<8xf32>
    %116 = vector.multi_reduction <minimumf>, %115, %cst_85 [1] : vector<8x896xf32> to vector<8xf32>
    %117 = vector.shape_cast %116 : vector<8xf32> to vector<8x1xf32>
    %118 = arith.subf %113, %117 : vector<8x1xf32>
    %c0_86 = arith.constant 0 : index
    %c7_87 = arith.constant 7 : index
    %119 = vector.load %arg6[%c0_86, %c7_87] : memref<8x128xf32, #tpu.memory_space<vmem>>, vector<8x1xf32>
    tpu.vector_store %arg6[%c0_86, %c7_87], %118 {strides = array<i32>} : memref<8x128xf32, #tpu.memory_space<vmem>>, vector<8x1xf32>,
    %c0_88 = arith.constant 0 : index
    %c17 = arith.constant 17 : index
    %120 = vector.load %arg6[%c0_88, %c17] : memref<8x128xf32, #tpu.memory_space<vmem>>, vector<8x1xf32>
    tpu.vector_store %arg6[%c0_88, %c17], %113 {strides = array<i32>} : memref<8x128xf32, #tpu.memory_space<vmem>>, vector<8x1xf32>,
    %c0_89 = arith.constant 0 : index
    %c27 = arith.constant 27 : index
    %121 = vector.load %arg6[%c0_89, %c27] : memref<8x128xf32, #tpu.memory_space<vmem>>, vector<8x1xf32>
    tpu.vector_store %arg6[%c0_89, %c27], %117 {strides = array<i32>} : memref<8x128xf32, #tpu.memory_space<vmem>>, vector<8x1xf32>,
    %c0_90 = arith.constant 0 : index
    %c0_91 = arith.constant 0 : index
    %122 = vector.load %arg1[%c0_90, %c0_91] : memref<8x896xf32, #tpu.memory_space<vmem>>, vector<8x896xf32>
    %c8 = arith.constant 8 : index
    %c0_92 = arith.constant 0 : index
    %123 = vector.load %arg2[%c8, %c0_92] : memref<10x896xf32, #tpu.memory_space<vmem>>, vector<1x896xf32>
    %c8_93 = arith.constant 8 : index
    %c0_94 = arith.constant 0 : index
    %124 = vector.load %arg3[%c8_93, %c0_94] : memref<10x896xf32, #tpu.memory_space<vmem>>, vector<1x896xf32>
    %125 = vector.broadcast %123 : vector<1x896xf32> to vector<8x896xf32>
    %126 = arith.addf %122, %125 : vector<8x896xf32>
    %cst_95 = arith.constant dense<0xFF800000> : vector<8xf32>
    %127 = vector.multi_reduction <maximumf>, %126, %cst_95 [1] : vector<8x896xf32> to vector<8xf32>
    %128 = vector.shape_cast %127 : vector<8xf32> to vector<8x1xf32>
    %129 = vector.broadcast %124 : vector<1x896xf32> to vector<8x896xf32>
    %130 = arith.subf %122, %129 : vector<8x896xf32>
    %cst_96 = arith.constant dense<0x7F800000> : vector<8xf32>
    %131 = vector.multi_reduction <minimumf>, %130, %cst_96 [1] : vector<8x896xf32> to vector<8xf32>
    %132 = vector.shape_cast %131 : vector<8xf32> to vector<8x1xf32>
    %133 = arith.subf %128, %132 : vector<8x1xf32>
    %c0_97 = arith.constant 0 : index
    %c8_98 = arith.constant 8 : index
    %134 = vector.load %arg6[%c0_97, %c8_98] : memref<8x128xf32, #tpu.memory_space<vmem>>, vector<8x1xf32>
    tpu.vector_store %arg6[%c0_97, %c8_98], %133 {strides = array<i32>} : memref<8x128xf32, #tpu.memory_space<vmem>>, vector<8x1xf32>,
    %c0_99 = arith.constant 0 : index
    %c18 = arith.constant 18 : index
    %135 = vector.load %arg6[%c0_99, %c18] : memref<8x128xf32, #tpu.memory_space<vmem>>, vector<8x1xf32>
    tpu.vector_store %arg6[%c0_99, %c18], %128 {strides = array<i32>} : memref<8x128xf32, #tpu.memory_space<vmem>>, vector<8x1xf32>,
    %c0_100 = arith.constant 0 : index
    %c28 = arith.constant 28 : index
    %136 = vector.load %arg6[%c0_100, %c28] : memref<8x128xf32, #tpu.memory_space<vmem>>, vector<8x1xf32>
    tpu.vector_store %arg6[%c0_100, %c28], %132 {strides = array<i32>} : memref<8x128xf32, #tpu.memory_space<vmem>>, vector<8x1xf32>,
    %c0_101 = arith.constant 0 : index
    %c0_102 = arith.constant 0 : index
    %137 = vector.load %arg1[%c0_101, %c0_102] : memref<8x896xf32, #tpu.memory_space<vmem>>, vector<8x896xf32>
    %c9 = arith.constant 9 : index
    %c0_103 = arith.constant 0 : index
    %138 = vector.load %arg2[%c9, %c0_103] : memref<10x896xf32, #tpu.memory_space<vmem>>, vector<1x896xf32>
    %c9_104 = arith.constant 9 : index
    %c0_105 = arith.constant 0 : index
    %139 = vector.load %arg3[%c9_104, %c0_105] : memref<10x896xf32, #tpu.memory_space<vmem>>, vector<1x896xf32>
    %140 = vector.broadcast %138 : vector<1x896xf32> to vector<8x896xf32>
    %141 = arith.addf %137, %140 : vector<8x896xf32>
    %cst_106 = arith.constant dense<0xFF800000> : vector<8xf32>
    %142 = vector.multi_reduction <maximumf>, %141, %cst_106 [1] : vector<8x896xf32> to vector<8xf32>
    %143 = vector.shape_cast %142 : vector<8xf32> to vector<8x1xf32>
    %144 = vector.broadcast %139 : vector<1x896xf32> to vector<8x896xf32>
    %145 = arith.subf %137, %144 : vector<8x896xf32>
    %cst_107 = arith.constant dense<0x7F800000> : vector<8xf32>
    %146 = vector.multi_reduction <minimumf>, %145, %cst_107 [1] : vector<8x896xf32> to vector<8xf32>
    %147 = vector.shape_cast %146 : vector<8xf32> to vector<8x1xf32>
    %148 = arith.subf %143, %147 : vector<8x1xf32>
    %c0_108 = arith.constant 0 : index
    %c9_109 = arith.constant 9 : index
    %149 = vector.load %arg6[%c0_108, %c9_109] : memref<8x128xf32, #tpu.memory_space<vmem>>, vector<8x1xf32>
    tpu.vector_store %arg6[%c0_108, %c9_109], %148 {strides = array<i32>} : memref<8x128xf32, #tpu.memory_space<vmem>>, vector<8x1xf32>,
    %c0_110 = arith.constant 0 : index
    %c19 = arith.constant 19 : index
    %150 = vector.load %arg6[%c0_110, %c19] : memref<8x128xf32, #tpu.memory_space<vmem>>, vector<8x1xf32>
    tpu.vector_store %arg6[%c0_110, %c19], %143 {strides = array<i32>} : memref<8x128xf32, #tpu.memory_space<vmem>>, vector<8x1xf32>,
    %c0_111 = arith.constant 0 : index
    %c29 = arith.constant 29 : index
    %151 = vector.load %arg6[%c0_111, %c29] : memref<8x128xf32, #tpu.memory_space<vmem>>, vector<8x1xf32>
    tpu.vector_store %arg6[%c0_111, %c29], %147 {strides = array<i32>} : memref<8x128xf32, #tpu.memory_space<vmem>>, vector<8x1xf32>,
    %152 = tpu.concatenate %13, %28, %43, %58, %73, %88, %103, %118, %133, %148 in 1 : vector<8x1xf32>, vector<8x1xf32>, vector<8x1xf32>, vector<8x1xf32>, vector<8x1xf32>, vector<8x1xf32>, vector<8x1xf32>, vector<8x1xf32>, vector<8x1xf32>, vector<8x1xf32> -> vector<8x10xf32>
    %cst_112 = arith.constant 0.000000e+00 : f32
    %153 = vector.broadcast %cst_112 : f32 to vector<8x10xf32>
    %154 = arith.cmpf ogt, %152, %153 : vector<8x10xf32>
    %cst_113 = arith.constant 0.00999999977 : f32
    %155 = vector.broadcast %cst_113 : f32 to vector<8x10xf32>
    %156 = arith.mulf %155, %152 : vector<8x10xf32>
    %157 = arith.select %154, %152, %156 : vector<8x10xi1>, vector<8x10xf32>
    %c0_114 = arith.constant 0 : index
    %c0_115 = arith.constant 0 : index
    %158 = vector.load %arg4[%c0_114, %c0_115] : memref<2x10xf32, #tpu.memory_space<vmem>>, vector<1x10xf32>
    %159 = vector.broadcast %158 : vector<1x10xf32> to vector<8x10xf32>
    %160 = arith.mulf %157, %159 : vector<8x10xf32>
    %cst_116 = arith.constant dense<0.000000e+00> : vector<8xf32>
    %161 = vector.multi_reduction <add>, %160, %cst_116 [1] : vector<8x10xf32> to vector<8xf32>
    %162 = vector.shape_cast %161 : vector<8xf32> to vector<8x1xf32>
    %c1_117 = arith.constant 1 : index
    %c0_118 = arith.constant 0 : index
    %163 = vector.load %arg4[%c1_117, %c0_118] : memref<2x10xf32, #tpu.memory_space<vmem>>, vector<1x10xf32>
    %164 = vector.broadcast %163 : vector<1x10xf32> to vector<8x10xf32>
    %165 = arith.mulf %157, %164 : vector<8x10xf32>
    %cst_119 = arith.constant dense<0.000000e+00> : vector<8xf32>
    %166 = vector.multi_reduction <add>, %165, %cst_119 [1] : vector<8x10xf32> to vector<8xf32>
    %167 = vector.shape_cast %166 : vector<8xf32> to vector<8x1xf32>
    %168 = tpu.concatenate %162, %167 in 1 : vector<8x1xf32>, vector<8x1xf32> -> vector<8x2xf32>
    %c0_120 = arith.constant 0 : index
    %c0_121 = arith.constant 0 : index
    %169 = vector.load %arg5[%c0_120, %c0_121] : memref<1x2xf32, #tpu.memory_space<vmem>>, vector<1x2xf32>
    %170 = vector.broadcast %169 : vector<1x2xf32> to vector<8x2xf32>
    %171 = arith.addf %168, %170 : vector<8x2xf32>
    %cst_122 = arith.constant dense<0xFF800000> : vector<8xf32>
    %172 = vector.multi_reduction <maximumf>, %171, %cst_122 [1] : vector<8x2xf32> to vector<8xf32>
    %173 = vector.shape_cast %172 : vector<8xf32> to vector<8x1xf32>
    %174 = vector.broadcast %173 : vector<8x1xf32> to vector<8x2xf32>
    %175 = arith.subf %171, %174 : vector<8x2xf32>
    %176 = math.exp %175 : vector<8x2xf32>
    %cst_123 = arith.constant dense<0.000000e+00> : vector<8xf32>
    %177 = vector.multi_reduction <add>, %176, %cst_123 [1] : vector<8x2xf32> to vector<8xf32>
    %178 = vector.shape_cast %177 : vector<8xf32> to vector<8x1xf32>
    %179 = math.log %178 : vector<8x1xf32>
    %180 = vector.broadcast %179 : vector<8x1xf32> to vector<8x2xf32>
    %181 = arith.subf %175, %180 : vector<8x2xf32>
    %c0_124 = arith.constant 0 : index
    %c30 = arith.constant 30 : index
    %182 = vector.load %arg6[%c0_124, %c30] : memref<8x128xf32, #tpu.memory_space<vmem>>, vector<8x2xf32>
    tpu.vector_store %arg6[%c0_124, %c30], %181 {strides = array<i32>} : memref<8x128xf32, #tpu.memory_space<vmem>>, vector<8x2xf32>,
    return
  }
  func.func @transform_0(%arg0: i32) -> (i32, i32) {
    %c0_i32 = arith.constant 0 : i32
    %c0_i32_0 = arith.constant 0 : i32
    return %arg0, %c0_i32 : i32, i32
  }
  func.func @transform_1(%arg0: i32) -> (i32, i32) {
    %c0_i32 = arith.constant 0 : i32
    %c0_i32_0 = arith.constant 0 : i32
    %c0_i32_1 = arith.constant 0 : i32
    return %c0_i32, %c0_i32_0 : i32, i32
  }
  func.func @transform_2(%arg0: i32) -> (i32, i32) {
    %c0_i32 = arith.constant 0 : i32
    %c0_i32_0 = arith.constant 0 : i32
    %c0_i32_1 = arith.constant 0 : i32
    return %c0_i32, %c0_i32_0 : i32, i32
  }
  func.func @transform_3(%arg0: i32) -> (i32, i32) {
    %c0_i32 = arith.constant 0 : i32
    %c0_i32_0 = arith.constant 0 : i32
    %c0_i32_1 = arith.constant 0 : i32
    return %c0_i32, %c0_i32_0 : i32, i32
  }
  func.func @transform_4(%arg0: i32) -> (i32, i32) {
    %c0_i32 = arith.constant 0 : i32
    %c0_i32_0 = arith.constant 0 : i32
    %c0_i32_1 = arith.constant 0 : i32
    return %c0_i32, %c0_i32_0 : i32, i32
  }
  func.func @transform_5(%arg0: i32) -> (i32, i32) {
    %c0_i32 = arith.constant 0 : i32
    %c0_i32_0 = arith.constant 0 : i32
    return %arg0, %c0_i32 : i32, i32
  }
}

</mosaic_0001>

<llo_original>
// kernel: tpu_custom_call.1
$region0: #{tpu_custom_call.1}
  #allocation0 [shape = 'u32[]', space=smem, size = 0x4, offset = 0x4, fixed_abs, tag = 'smem constant byte address 0x4 - core index']
  #allocation1 [shape = 'u32[144,128]{1,0:T(1,128)}', space=vmem, size = 0x12000, scoped, tag = 'internal scratch']
  %s0 = inlined_call_operand.hbm [shape: f32[8,896], index: 0, kind: input, shape index: {}]
  %s1 = inlined_call_operand.hbm [shape: f32[10,896], index: 1, kind: input, shape index: {}]
  %s2 = inlined_call_operand.hbm [shape: f32[10,896], index: 2, kind: input, shape index: {}]
  %s3 = inlined_call_operand.vmem [shape: f32[2,10], index: 3, kind: input, shape index: {}]
  %s4 = inlined_call_operand.vmem [shape: f32[1,2], index: 4, kind: input, shape index: {}]
  %s5 = inlined_call_operand.hbm [shape: f32[8,128], index: 5, kind: output, shape index: {}]
  %s6 = sld [smem:[#allocation0]]
  $region42: #{tpu_custom_call.1} parent=0
    _
  %s8 = ssub.s32 1, %s6
  %s9 = scalar_select 0, %s8, %s6
  $region1: #{tpu_custom_call.1} parent=0
    #allocation2 [shape = 'u8[28672]{0}', space=vmem, size = 0x7000, scoped, tag = 'input window, operand 0, single buffered']
    #allocation3 [shape = 's32[1]{0}', space=sflag, size = 0x4, scoped, tag = 'scoped memory for tpu_custom_call.1']
    #allocation4 [shape = 's32[1]{0}', space=sflag, size = 0x4, scoped, tag = 'scoped memory for tpu_custom_call.1']
    #allocation5 [shape = 'u8[57344]{0}', space=vmem, size = 0xe000, scoped, tag = 'input window, operand 1, single buffered']
    #allocation6 [shape = 's32[1]{0}', space=sflag, size = 0x4, scoped, tag = 'scoped memory for tpu_custom_call.1']
    #allocation7 [shape = 'u8[57344]{0}', space=vmem, size = 0xe000, scoped, tag = 'input window, operand 2, single buffered']
    #allocation8 [shape = 'u8[4096]{0}', space=vmem, size = 0x1000, scoped, tag = 'output window, operand 0, single buffered']
    %10 = vsyncpa [#allocation3], 0
    %11 = vsyncpa [#allocation6], 0
    %12 = vsyncpa [#allocation4], 0
    // Predicated region
    $region2: #{tpu_custom_call.1} parent=1 // pred_check
      _
    $region3: #{tpu_custom_call.1} parent=1 // pred_check_branch
      %14 = sbr.rel (0) target = $region5
    $region4: #{tpu_custom_call.1} parent=1 // pred_region
      %s16 = ssub.s32 896, 896
      %17 = vsyncadd [#allocation3], %s16
      %s19 = sshll.u32 [#allocation2], 4
      %s20 = int_to_ptr.vmem [resolvable:$true] %s19
      %22 = dma.hbm_to_vmem [thread:$0]  %s0, 896, %s20, [#allocation3]
    $region5: #{tpu_custom_call.1} parent=1 // pred_fallthru
      _
    // Predicated region
    $region6: #{tpu_custom_call.1} parent=1 // pred_check
      _
    $region7: #{tpu_custom_call.1} parent=1 // pred_check_branch
      %24 = sbr.rel (0) target = $region9
    $region8: #{tpu_custom_call.1} parent=1 // pred_region
      %s26 = ssub.s32 1792, 1792
      %27 = vsyncadd [#allocation6], %s26
      %s28 = sshll.u32 [#allocation5], 4
      %s29 = int_to_ptr.vmem [resolvable:$true] %s28
      %34 = dma.hbm_to_vmem [thread:$0]  %s1, 1792, %s29, [#allocation6], 896, 896, 56
    $region9: #{tpu_custom_call.1} parent=1 // pred_fallthru
      _
    // Predicated region
    $region10: #{tpu_custom_call.1} parent=1 // pred_check
      _
    $region11: #{tpu_custom_call.1} parent=1 // pred_check_branch
      %36 = sbr.rel (0) target = $region13
    $region12: #{tpu_custom_call.1} parent=1 // pred_region
      %s38 = ssub.s32 1792, 1792
      %39 = vsyncadd [#allocation6], %s38
      %s40 = sshll.u32 [#allocation7], 4
      %s41 = int_to_ptr.vmem [resolvable:$true] %s40
      %46 = dma.hbm_to_vmem [thread:$0]  %s2, 1792, %s41, [#allocation6], 896, 896, 56
    $region13: #{tpu_custom_call.1} parent=1 // pred_fallthru
      _
    // Predicated region
    $region14: #{tpu_custom_call.1} parent=1 // pred_check
      _
    $region15: #{tpu_custom_call.1} parent=1 // pred_check_branch
      %48 = sbr.rel (0) target = $region17
    $region16: #{tpu_custom_call.1} parent=1 // pred_region
      _
    $region17: #{tpu_custom_call.1} parent=1 // pred_fallthru
      _
    // Predicated region
    $region18: #{tpu_custom_call.1} parent=1 // pred_check
      _
    $region19: #{tpu_custom_call.1} parent=1 // pred_check_branch
      %50 = sbr.rel (0) target = $region21
    $region20: #{tpu_custom_call.1} parent=1 // pred_region
      _
    $region21: #{tpu_custom_call.1} parent=1 // pred_fallthru
      _
    // Predicated region
    $region22: #{tpu_custom_call.1} parent=1 // pred_check
      _
    $region23: #{tpu_custom_call.1} parent=1 // pred_check_branch
      %52 = sbr.rel (0) target = $region25
    $region24: #{tpu_custom_call.1} parent=1 // pred_region
      %53 = dma.done [#allocation3], 896
    $region25: #{tpu_custom_call.1} parent=1 // pred_fallthru
      _
    // Predicated region
    $region26: #{tpu_custom_call.1} parent=1 // pred_check
      _
    $region27: #{tpu_custom_call.1} parent=1 // pred_check_branch
      %55 = sbr.rel (0) target = $region29
    $region28: #{tpu_custom_call.1} parent=1 // pred_region
      %56 = dma.done [#allocation6], 1792
    $region29: #{tpu_custom_call.1} parent=1 // pred_fallthru
      _
    // Predicated region
    $region30: #{tpu_custom_call.1} parent=1 // pred_check
      _
    $region31: #{tpu_custom_call.1} parent=1 // pred_check_branch
      %58 = sbr.rel (0) target = $region33
    $region32: #{tpu_custom_call.1} parent=1 // pred_region
      %59 = dma.done [#allocation6], 1792
    $region33: #{tpu_custom_call.1} parent=1 // pred_fallthru
      _
    %60 = vst [vmem:[#allocation8] sm:$0xff] 0.0
    %v61 = vld [vmem:[#allocation2] sm:$0xff]
    %v62 = vld [vmem:[#allocation2 + $0x8] sm:$0xff]
    %v63 = vld [vmem:[#allocation2 + $0x10] sm:$0xff]
    %v64 = vld [vmem:[#allocation2 + $0x18] sm:$0xff]
    %v65 = vld [vmem:[#allocation2 + $0x20] sm:$0xff]
    %v66 = vld [vmem:[#allocation2 + $0x28] sm:$0xff]
    %v67 = vld [vmem:[#allocation2 + $0x30] sm:$0xff]
    %v68 = vld [vmem:[#allocation5] ss:$8 sm:$0xf]
    %v69 = vld [vmem:[#allocation5] ss:$8 sm:$0xf0]
    %v70 = vor.u32 %v68, %v69
    %v71 = vld [vmem:[#allocation7] ss:$8 sm:$0xf]
    %v72 = vld [vmem:[#allocation7] ss:$8 sm:$0xf0]
    %v73 = vor.u32 %v71, %v72
    %v75 = vlaneseq
    %v76 = vshrl.u32 %v75, 7
    %v77 = vsub.s32 0, %v76
    %v78 = vrot.slane %v70, %v77
    %v79 = vlaneseq
    %v80 = vshrl.u32 %v79, 7
    %v81 = vsub.s32 1, %v80
    %v82 = vrot.slane %v70, %v81
    %v83 = vlaneseq
    %v84 = vshrl.u32 %v83, 7
    %v85 = vsub.s32 2, %v84
    %v86 = vrot.slane %v70, %v85
    %v87 = vlaneseq
    %v88 = vshrl.u32 %v87, 7
    %v89 = vsub.s32 3, %v88
    %v90 = vrot.slane %v70, %v89
    %v91 = vlaneseq
    %v92 = vshrl.u32 %v91, 7
    %v93 = vsub.s32 4, %v92
    %v94 = vrot.slane %v70, %v93
    %v95 = vlaneseq
    %v96 = vshrl.u32 %v95, 7
    %v97 = vsub.s32 5, %v96
    %v98 = vrot.slane %v70, %v97
    %v99 = vlaneseq
    %v100 = vshrl.u32 %v99, 7
    %v101 = vsub.s32 6, %v100
    %v102 = vrot.slane %v70, %v101
    %v110 = vadd.f32 %v61, %v78
    %v111 = vadd.f32 %v62, %v82
    %v112 = vadd.f32 %v63, %v86
    %v113 = vadd.f32 %v64, %v90
    %v114 = vadd.f32 %v65, %v94
    %v115 = vadd.f32 %v66, %v98
    %v116 = vadd.f32 %v67, %v102
    %v117 = vmax.f32 %v110, %v114
    %v118 = vmax.f32 %v111, %v115
    %v119 = vmax.f32 %v112, %v116
    %v120 = vmax.f32 %v117, %v118
    %v121 = vmax.f32 %v119, %v113
    %v122 = vmax.f32 %v120, %v121
    %123 = vmax.xlane.f32.xlu0 %v122
    %v124 = vpop.xlane.xlu0 %123
    %v126 = vlaneseq
    %v127 = vshrl.u32 %v126, 7
    %v128 = vsub.s32 0, %v127
    %v129 = vrot.slane %v73, %v128
    %v130 = vlaneseq
    %v131 = vshrl.u32 %v130, 7
    %v132 = vsub.s32 1, %v131
    %v133 = vrot.slane %v73, %v132
    %v134 = vlaneseq
    %v135 = vshrl.u32 %v134, 7
    %v136 = vsub.s32 2, %v135
    %v137 = vrot.slane %v73, %v136
    %v138 = vlaneseq
    %v139 = vshrl.u32 %v138, 7
    %v140 = vsub.s32 3, %v139
    %v141 = vrot.slane %v73, %v140
    %v142 = vlaneseq
    %v143 = vshrl.u32 %v142, 7
    %v144 = vsub.s32 4, %v143
    %v145 = vrot.slane %v73, %v144
    %v146 = vlaneseq
    %v147 = vshrl.u32 %v146, 7
    %v148 = vsub.s32 5, %v147
    %v149 = vrot.slane %v73, %v148
    %v150 = vlaneseq
    %v151 = vshrl.u32 %v150, 7
    %v152 = vsub.s32 6, %v151
    %v153 = vrot.slane %v73, %v152
    %v161 = vsub.f32 %v61, %v129
    %v162 = vsub.f32 %v62, %v133
    %v163 = vsub.f32 %v63, %v137
    %v164 = vsub.f32 %v64, %v141
    %v165 = vsub.f32 %v65, %v145
    %v166 = vsub.f32 %v66, %v149
    %v167 = vsub.f32 %v67, %v153
    %v168 = vmin.f32 %v161, %v165
    %v169 = vmin.f32 %v162, %v166
    %v170 = vmin.f32 %v163, %v167
    %v171 = vmin.f32 %v168, %v169
    %v172 = vmin.f32 %v170, %v164
    %v173 = vmin.f32 %v171, %v172
    %174 = vmin.xlane.f32.xlu0 %v173
    %v175 = vpop.xlane.xlu0 %174
    %v176 = vsub.f32 %v124, %v175
    %vm177 = vcmask 7168
    %178 = vst.msk [vmem:[#allocation8] sm:$0xff] %vm177, %v176
    %vm179 = vcmask 89168
    %180 = vst.msk [vmem:[#allocation8] sm:$0xff] %vm179, %v124
    %vm181 = vcmask 171168
    %182 = vst.msk [vmem:[#allocation8] sm:$0xff] %vm181, %v175
    %v183 = vld [vmem:[#allocation2] sm:$0xff]
    %v184 = vld [vmem:[#allocation2 + $0x8] sm:$0xff]
    %v185 = vld [vmem:[#allocation2 + $0x10] sm:$0xff]
    %v186 = vld [vmem:[#allocation2 + $0x18] sm:$0xff]
    %v187 = vld [vmem:[#allocation2 + $0x20] sm:$0xff]
    %v188 = vld [vmem:[#allocation2 + $0x28] sm:$0xff]
    %v189 = vld [vmem:[#allocation2 + $0x30] sm:$0xff]
    %s190 = scalar_lea.vmem [#allocation5], 1
    %v191 = vld [vmem:[%s190] ss:$8 sm:$0xf]
    %v192 = vld [vmem:[%s190] ss:$8 sm:$0xf0]
    %v193 = vor.u32 %v191, %v192
    %s194 = scalar_lea.vmem [#allocation7], 1
    %v195 = vld [vmem:[%s194] ss:$8 sm:$0xf]
    %v196 = vld [vmem:[%s194] ss:$8 sm:$0xf0]
    %v197 = vor.u32 %v195, %v196
    %v199 = vlaneseq
    %v200 = vshrl.u32 %v199, 7
    %v201 = vsub.s32 0, %v200
    %v202 = vrot.slane %v193, %v201
    %v203 = vlaneseq
    %v204 = vshrl.u32 %v203, 7
    %v205 = vsub.s32 1, %v204
    %v206 = vrot.slane %v193, %v205
    %v207 = vlaneseq
    %v208 = vshrl.u32 %v207, 7
    %v209 = vsub.s32 2, %v208
    %v210 = vrot.slane %v193, %v209
    %v211 = vlaneseq
    %v212 = vshrl.u32 %v211, 7
    %v213 = vsub.s32 3, %v212
    %v214 = vrot.slane %v193, %v213
    %v215 = vlaneseq
    %v216 = vshrl.u32 %v215, 7
    %v217 = vsub.s32 4, %v216
    %v218 = vrot.slane %v193, %v217
    %v219 = vlaneseq
    %v220 = vshrl.u32 %v219, 7
    %v221 = vsub.s32 5, %v220
    %v222 = vrot.slane %v193, %v221
    %v223 = vlaneseq
    %v224 = vshrl.u32 %v223, 7
    %v225 = vsub.s32 6, %v224
    %v226 = vrot.slane %v193, %v225
    %v234 = vadd.f32 %v183, %v202
    %v235 = vadd.f32 %v184, %v206
    %v236 = vadd.f32 %v185, %v210
    %v237 = vadd.f32 %v186, %v214
    %v238 = vadd.f32 %v187, %v218
    %v239 = vadd.f32 %v188, %v222
    %v240 = vadd.f32 %v189, %v226
    %v241 = vmax.f32 %v234, %v238
    %v242 = vmax.f32 %v235, %v239
    %v243 = vmax.f32 %v236, %v240
    %v244 = vmax.f32 %v241, %v242
    %v245 = vmax.f32 %v243, %v237
    %v246 = vmax.f32 %v244, %v245
    %247 = vmax.xlane.f32.xlu0 %v246
    %v248 = vpop.xlane.xlu0 %247
    %v250 = vlaneseq
    %v251 = vshrl.u32 %v250, 7
    %v252 = vsub.s32 0, %v251
    %v253 = vrot.slane %v197, %v252
    %v254 = vlaneseq
    %v255 = vshrl.u32 %v254, 7
    %v256 = vsub.s32 1, %v255
    %v257 = vrot.slane %v197, %v256
    %v258 = vlaneseq
    %v259 = vshrl.u32 %v258, 7
    %v260 = vsub.s32 2, %v259
    %v261 = vrot.slane %v197, %v260
    %v262 = vlaneseq
    %v263 = vshrl.u32 %v262, 7
    %v264 = vsub.s32 3, %v263
    %v265 = vrot.slane %v197, %v264
    %v266 = vlaneseq
    %v267 = vshrl.u32 %v266, 7
    %v268 = vsub.s32 4, %v267
    %v269 = vrot.slane %v197, %v268
    %v270 = vlaneseq
    %v271 = vshrl.u32 %v270, 7
    %v272 = vsub.s32 5, %v271
    %v273 = vrot.slane %v197, %v272
    %v274 = vlaneseq
    %v275 = vshrl.u32 %v274, 7
    %v276 = vsub.s32 6, %v275
    %v277 = vrot.slane %v197, %v276
    %v285 = vsub.f32 %v183, %v253
    %v286 = vsub.f32 %v184, %v257
    %v287 = vsub.f32 %v185, %v261
    %v288 = vsub.f32 %v186, %v265
    %v289 = vsub.f32 %v187, %v269
    %v290 = vsub.f32 %v188, %v273
    %v291 = vsub.f32 %v189, %v277
    %v292 = vmin.f32 %v285, %v289
    %v293 = vmin.f32 %v286, %v290
    %v294 = vmin.f32 %v287, %v291
    %v295 = vmin.f32 %v292, %v293
    %v296 = vmin.f32 %v294, %v288
    %v297 = vmin.f32 %v295, %v296
    %298 = vmin.xlane.f32.xlu0 %v297
    %v299 = vpop.xlane.xlu0 %298
    %v300 = vsub.f32 %v248, %v299
    %vm301 = vcmask 15368
    %302 = vst.msk [vmem:[#allocation8] sm:$0xff] %vm301, %v300
    %vm303 = vcmask 97368
    %304 = vst.msk [vmem:[#allocation8] sm:$0xff] %vm303, %v248
    %vm305 = vcmask 179368
    %306 = vst.msk [vmem:[#allocation8] sm:$0xff] %vm305, %v299
    %v307 = vld [vmem:[#allocation2] sm:$0xff]
    %v308 = vld [vmem:[#allocation2 + $0x8] sm:$0xff]
    %v309 = vld [vmem:[#allocation2 + $0x10] sm:$0xff]
    %v310 = vld [vmem:[#allocation2 + $0x18] sm:$0xff]
    %v311 = vld [vmem:[#allocation2 + $0x20] sm:$0xff]
    %v312 = vld [vmem:[#allocation2 + $0x28] sm:$0xff]
    %v313 = vld [vmem:[#allocation2 + $0x30] sm:$0xff]
    %s314 = scalar_lea.vmem [#allocation5], 2
    %v315 = vld [vmem:[%s314] ss:$8 sm:$0xf]
    %v316 = vld [vmem:[%s314] ss:$8 sm:$0xf0]
    %v317 = vor.u32 %v315, %v316
    %s318 = scalar_lea.vmem [#allocation7], 2
    %v319 = vld [vmem:[%s318] ss:$8 sm:$0xf]
    %v320 = vld [vmem:[%s318] ss:$8 sm:$0xf0]
    %v321 = vor.u32 %v319, %v320
    %v323 = vlaneseq
    %v324 = vshrl.u32 %v323, 7
    %v325 = vsub.s32 0, %v324
    %v326 = vrot.slane %v317, %v325
    %v327 = vlaneseq
    %v328 = vshrl.u32 %v327, 7
    %v329 = vsub.s32 1, %v328
    %v330 = vrot.slane %v317, %v329
    %v331 = vlaneseq
    %v332 = vshrl.u32 %v331, 7
    %v333 = vsub.s32 2, %v332
    %v334 = vrot.slane %v317, %v333
    %v335 = vlaneseq
    %v336 = vshrl.u32 %v335, 7
    %v337 = vsub.s32 3, %v336
    %v338 = vrot.slane %v317, %v337
    %v339 = vlaneseq
    %v340 = vshrl.u32 %v339, 7
    %v341 = vsub.s32 4, %v340
    %v342 = vrot.slane %v317, %v341
    %v343 = vlaneseq
    %v344 = vshrl.u32 %v343, 7
    %v345 = vsub.s32 5, %v344
    %v346 = vrot.slane %v317, %v345
    %v347 = vlaneseq
    %v348 = vshrl.u32 %v347, 7
    %v349 = vsub.s32 6, %v348
    %v350 = vrot.slane %v317, %v349
    %v358 = vadd.f32 %v307, %v326
    %v359 = vadd.f32 %v308, %v330
    %v360 = vadd.f32 %v309, %v334
    %v361 = vadd.f32 %v310, %v338
    %v362 = vadd.f32 %v311, %v342
    %v363 = vadd.f32 %v312, %v346
    %v364 = vadd.f32 %v313, %v350
    %v365 = vmax.f32 %v358, %v362
    %v366 = vmax.f32 %v359, %v363
    %v367 = vmax.f32 %v360, %v364
    %v368 = vmax.f32 %v365, %v366
    %v369 = vmax.f32 %v367, %v361
    %v370 = vmax.f32 %v368, %v369
    %371 = vmax.xlane.f32.xlu0 %v370
    %v372 = vpop.xlane.xlu0 %371
    %v374 = vlaneseq
    %v375 = vshrl.u32 %v374, 7
    %v376 = vsub.s32 0, %v375
    %v377 = vrot.slane %v321, %v376
    %v378 = vlaneseq
    %v379 = vshrl.u32 %v378, 7
    %v380 = vsub.s32 1, %v379
    %v381 = vrot.slane %v321, %v380
    %v382 = vlaneseq
    %v383 = vshrl.u32 %v382, 7
    %v384 = vsub.s32 2, %v383
    %v385 = vrot.slane %v321, %v384
    %v386 = vlaneseq
    %v387 = vshrl.u32 %v386, 7
    %v388 = vsub.s32 3, %v387
    %v389 = vrot.slane %v321, %v388
    %v390 = vlaneseq
    %v391 = vshrl.u32 %v390, 7
    %v392 = vsub.s32 4, %v391
    %v393 = vrot.slane %v321, %v392
    %v394 = vlaneseq
    %v395 = vshrl.u32 %v394, 7
    %v396 = vsub.s32 5, %v395
    %v397 = vrot.slane %v321, %v396
    %v398 = vlaneseq
    %v399 = vshrl.u32 %v398, 7
    %v400 = vsub.s32 6, %v399
    %v401 = vrot.slane %v321, %v400
    %v409 = vsub.f32 %v307, %v377
    %v410 = vsub.f32 %v308, %v381
    %v411 = vsub.f32 %v309, %v385
    %v412 = vsub.f32 %v310, %v389
    %v413 = vsub.f32 %v311, %v393
    %v414 = vsub.f32 %v312, %v397
    %v415 = vsub.f32 %v313, %v401
    %v416 = vmin.f32 %v409, %v413
    %v417 = vmin.f32 %v410, %v414
    %v418 = vmin.f32 %v411, %v415
    %v419 = vmin.f32 %v416, %v417
    %v420 = vmin.f32 %v418, %v412
    %v421 = vmin.f32 %v419, %v420
    %422 = vmin.xlane.f32.xlu0 %v421
    %v423 = vpop.xlane.xlu0 %422
    %v424 = vsub.f32 %v372, %v423
    %vm425 = vcmask 23568
    %426 = vst.msk [vmem:[#allocation8] sm:$0xff] %vm425, %v424
    %vm427 = vcmask 105568
    %428 = vst.msk [vmem:[#allocation8] sm:$0xff] %vm427, %v372
    %vm429 = vcmask 187568
    %430 = vst.msk [vmem:[#allocation8] sm:$0xff] %vm429, %v423
    %v431 = vld [vmem:[#allocation2] sm:$0xff]
    %v432 = vld [vmem:[#allocation2 + $0x8] sm:$0xff]
    %v433 = vld [vmem:[#allocation2 + $0x10] sm:$0xff]
    %v434 = vld [vmem:[#allocation2 + $0x18] sm:$0xff]
    %v435 = vld [vmem:[#allocation2 + $0x20] sm:$0xff]
    %v436 = vld [vmem:[#allocation2 + $0x28] sm:$0xff]
    %v437 = vld [vmem:[#allocation2 + $0x30] sm:$0xff]
    %s438 = scalar_lea.vmem [#allocation5], 3
    %v439 = vld [vmem:[%s438] ss:$8 sm:$0xf]
    %v440 = vld [vmem:[%s438] ss:$8 sm:$0xf0]
    %v441 = vor.u32 %v439, %v440
    %s442 = scalar_lea.vmem [#allocation7], 3
    %v443 = vld [vmem:[%s442] ss:$8 sm:$0xf]
    %v444 = vld [vmem:[%s442] ss:$8 sm:$0xf0]
    %v445 = vor.u32 %v443, %v444
    %v447 = vlaneseq
    %v448 = vshrl.u32 %v447, 7
    %v449 = vsub.s32 0, %v448
    %v450 = vrot.slane %v441, %v449
    %v451 = vlaneseq
    %v452 = vshrl.u32 %v451, 7
    %v453 = vsub.s32 1, %v452
    %v454 = vrot.slane %v441, %v453
    %v455 = vlaneseq
    %v456 = vshrl.u32 %v455, 7
    %v457 = vsub.s32 2, %v456
    %v458 = vrot.slane %v441, %v457
    %v459 = vlaneseq
    %v460 = vshrl.u32 %v459, 7
    %v461 = vsub.s32 3, %v460
    %v462 = vrot.slane %v441, %v461
    %v463 = vlaneseq
    %v464 = vshrl.u32 %v463, 7
    %v465 = vsub.s32 4, %v464
    %v466 = vrot.slane %v441, %v465
    %v467 = vlaneseq
    %v468 = vshrl.u32 %v467, 7
    %v469 = vsub.s32 5, %v468
    %v470 = vrot.slane %v441, %v469
    %v471 = vlaneseq
    %v472 = vshrl.u32 %v471, 7
    %v473 = vsub.s32 6, %v472
    %v474 = vrot.slane %v441, %v473
    %v482 = vadd.f32 %v431, %v450
    %v483 = vadd.f32 %v432, %v454
    %v484 = vadd.f32 %v433, %v458
    %v485 = vadd.f32 %v434, %v462
    %v486 = vadd.f32 %v435, %v466
    %v487 = vadd.f32 %v436, %v470
    %v488 = vadd.f32 %v437, %v474
    %v489 = vmax.f32 %v482, %v486
    %v490 = vmax.f32 %v483, %v487
    %v491 = vmax.f32 %v484, %v488
    %v492 = vmax.f32 %v489, %v490
    %v493 = vmax.f32 %v491, %v485
    %v494 = vmax.f32 %v492, %v493
    %495 = vmax.xlane.f32.xlu0 %v494
    %v496 = vpop.xlane.xlu0 %495
    %v498 = vlaneseq
    %v499 = vshrl.u32 %v498, 7
    %v500 = vsub.s32 0, %v499
    %v501 = vrot.slane %v445, %v500
    %v502 = vlaneseq
    %v503 = vshrl.u32 %v502, 7
    %v504 = vsub.s32 1, %v503
    %v505 = vrot.slane %v445, %v504
    %v506 = vlaneseq
    %v507 = vshrl.u32 %v506, 7
    %v508 = vsub.s32 2, %v507
    %v509 = vrot.slane %v445, %v508
    %v510 = vlaneseq
    %v511 = vshrl.u32 %v510, 7
    %v512 = vsub.s32 3, %v511
    %v513 = vrot.slane %v445, %v512
    %v514 = vlaneseq
    %v515 = vshrl.u32 %v514, 7
    %v516 = vsub.s32 4, %v515
    %v517 = vrot.slane %v445, %v516
    %v518 = vlaneseq
    %v519 = vshrl.u32 %v518, 7
    %v520 = vsub.s32 5, %v519
    %v521 = vrot.slane %v445, %v520
    %v522 = vlaneseq
    %v523 = vshrl.u32 %v522, 7
    %v524 = vsub.s32 6, %v523
    %v525 = vrot.slane %v445, %v524
    %v533 = vsub.f32 %v431, %v501
    %v534 = vsub.f32 %v432, %v505
    %v535 = vsub.f32 %v433, %v509
    %v536 = vsub.f32 %v434, %v513
    %v537 = vsub.f32 %v435, %v517
    %v538 = vsub.f32 %v436, %v521
    %v539 = vsub.f32 %v437, %v525
    %v540 = vmin.f32 %v533, %v537
    %v541 = vmin.f32 %v534, %v538
    %v542 = vmin.f32 %v535, %v539
    %v543 = vmin.f32 %v540, %v541
    %v544 = vmin.f32 %v542, %v536
    %v545 = vmin.f32 %v543, %v544
    %546 = vmin.xlane.f32.xlu0 %v545
    %v547 = vpop.xlane.xlu0 %546
    %v548 = vsub.f32 %v496, %v547
    %vm549 = vcmask 31768
    %550 = vst.msk [vmem:[#allocation8] sm:$0xff] %vm549, %v548
    %vm551 = vcmask 113768
    %552 = vst.msk [vmem:[#allocation8] sm:$0xff] %vm551, %v496
    %vm553 = vcmask 195768
    %554 = vst.msk [vmem:[#allocation8] sm:$0xff] %vm553, %v547
    %v555 = vld [vmem:[#allocation2] sm:$0xff]
    %v556 = vld [vmem:[#allocation2 + $0x8] sm:$0xff]
    %v557 = vld [vmem:[#allocation2 + $0x10] sm:$0xff]
    %v558 = vld [vmem:[#allocation2 + $0x18] sm:$0xff]
    %v559 = vld [vmem:[#allocation2 + $0x20] sm:$0xff]
    %v560 = vld [vmem:[#allocation2 + $0x28] sm:$0xff]
    %v561 = vld [vmem:[#allocation2 + $0x30] sm:$0xff]
    %s562 = scalar_lea.vmem [#allocation5], 4
    %v563 = vld [vmem:[%s562] ss:$8 sm:$0xf]
    %v564 = vld [vmem:[%s562] ss:$8 sm:$0xf0]
    %v565 = vor.u32 %v563, %v564
    %s566 = scalar_lea.vmem [#allocation7], 4
    %v567 = vld [vmem:[%s566] ss:$8 sm:$0xf]
    %v568 = vld [vmem:[%s566] ss:$8 sm:$0xf0]
    %v569 = vor.u32 %v567, %v568
    %v571 = vlaneseq
    %v572 = vshrl.u32 %v571, 7
    %v573 = vsub.s32 0, %v572
    %v574 = vrot.slane %v565, %v573
    %v575 = vlaneseq
    %v576 = vshrl.u32 %v575, 7
    %v577 = vsub.s32 1, %v576
    %v578 = vrot.slane %v565, %v577
    %v579 = vlaneseq
    %v580 = vshrl.u32 %v579, 7
    %v581 = vsub.s32 2, %v580
    %v582 = vrot.slane %v565, %v581
    %v583 = vlaneseq
    %v584 = vshrl.u32 %v583, 7
    %v585 = vsub.s32 3, %v584
    %v586 = vrot.slane %v565, %v585
    %v587 = vlaneseq
    %v588 = vshrl.u32 %v587, 7
    %v589 = vsub.s32 4, %v588
    %v590 = vrot.slane %v565, %v589
    %v591 = vlaneseq
    %v592 = vshrl.u32 %v591, 7
    %v593 = vsub.s32 5, %v592
    %v594 = vrot.slane %v565, %v593
    %v595 = vlaneseq
    %v596 = vshrl.u32 %v595, 7
    %v597 = vsub.s32 6, %v596
    %v598 = vrot.slane %v565, %v597
    %v606 = vadd.f32 %v555, %v574
    %v607 = vadd.f32 %v556, %v578
    %v608 = vadd.f32 %v557, %v582
    %v609 = vadd.f32 %v558, %v586
    %v610 = vadd.f32 %v559, %v590
    %v611 = vadd.f32 %v560, %v594
    %v612 = vadd.f32 %v561, %v598
    %v613 = vmax.f32 %v606, %v610
    %v614 = vmax.f32 %v607, %v611
    %v615 = vmax.f32 %v608, %v612
    %v616 = vmax.f32 %v613, %v614
    %v617 = vmax.f32 %v615, %v609
    %v618 = vmax.f32 %v616, %v617
    %619 = vmax.xlane.f32.xlu0 %v618
    %v620 = vpop.xlane.xlu0 %619
    %v622 = vlaneseq
    %v623 = vshrl.u32 %v622, 7
    %v624 = vsub.s32 0, %v623
    %v625 = vrot.slane %v569, %v624
    %v626 = vlaneseq
    %v627 = vshrl.u32 %v626, 7
    %v628 = vsub.s32 1, %v627
    %v629 = vrot.slane %v569, %v628
    %v630 = vlaneseq
    %v631 = vshrl.u32 %v630, 7
    %v632 = vsub.s32 2, %v631
    %v633 = vrot.slane %v569, %v632
    %v634 = vlaneseq
    %v635 = vshrl.u32 %v634, 7
    %v636 = vsub.s32 3, %v635
    %v637 = vrot.slane %v569, %v636
    %v638 = vlaneseq
    %v639 = vshrl.u32 %v638, 7
    %v640 = vsub.s32 4, %v639
    %v641 = vrot.slane %v569, %v640
    %v642 = vlaneseq
    %v643 = vshrl.u32 %v642, 7
    %v644 = vsub.s32 5, %v643
    %v645 = vrot.slane %v569, %v644
    %v646 = vlaneseq
    %v647 = vshrl.u32 %v646, 7
    %v648 = vsub.s32 6, %v647
    %v649 = vrot.slane %v569, %v648
    %v657 = vsub.f32 %v555, %v625
    %v658 = vsub.f32 %v556, %v629
    %v659 = vsub.f32 %v557, %v633
    %v660 = vsub.f32 %v558, %v637
    %v661 = vsub.f32 %v559, %v641
    %v662 = vsub.f32 %v560, %v645
    %v663 = vsub.f32 %v561, %v649
    %v664 = vmin.f32 %v657, %v661
    %v665 = vmin.f32 %v658, %v662
    %v666 = vmin.f32 %v659, %v663
    %v667 = vmin.f32 %v664, %v665
    %v668 = vmin.f32 %v666, %v660
    %v669 = vmin.f32 %v667, %v668
    %670 = vmin.xlane.f32.xlu0 %v669
    %v671 = vpop.xlane.xlu0 %670
    %v672 = vsub.f32 %v620, %v671
    %vm673 = vcmask 39968
    %674 = vst.msk [vmem:[#allocation8] sm:$0xff] %vm673, %v672
    %vm675 = vcmask 121968
    %676 = vst.msk [vmem:[#allocation8] sm:$0xff] %vm675, %v620
    %vm677 = vcmask 203968
    %678 = vst.msk [vmem:[#allocation8] sm:$0xff] %vm677, %v671
    %v679 = vld [vmem:[#allocation2] sm:$0xff]
    %v680 = vld [vmem:[#allocation2 + $0x8] sm:$0xff]
    %v681 = vld [vmem:[#allocation2 + $0x10] sm:$0xff]
    %v682 = vld [vmem:[#allocation2 + $0x18] sm:$0xff]
    %v683 = vld [vmem:[#allocation2 + $0x20] sm:$0xff]
    %v684 = vld [vmem:[#allocation2 + $0x28] sm:$0xff]
    %v685 = vld [vmem:[#allocation2 + $0x30] sm:$0xff]
    %s686 = scalar_lea.vmem [#allocation5], 5
    %v687 = vld [vmem:[%s686] ss:$8 sm:$0xf]
    %v688 = vld [vmem:[%s686] ss:$8 sm:$0xf0]
    %v689 = vor.u32 %v687, %v688
    %s690 = scalar_lea.vmem [#allocation7], 5
    %v691 = vld [vmem:[%s690] ss:$8 sm:$0xf]
    %v692 = vld [vmem:[%s690] ss:$8 sm:$0xf0]
    %v693 = vor.u32 %v691, %v692
    %v695 = vlaneseq
    %v696 = vshrl.u32 %v695, 7
    %v697 = vsub.s32 0, %v696
    %v698 = vrot.slane %v689, %v697
    %v699 = vlaneseq
    %v700 = vshrl.u32 %v699, 7
    %v701 = vsub.s32 1, %v700
    %v702 = vrot.slane %v689, %v701
    %v703 = vlaneseq
    %v704 = vshrl.u32 %v703, 7
    %v705 = vsub.s32 2, %v704
    %v706 = vrot.slane %v689, %v705
    %v707 = vlaneseq
    %v708 = vshrl.u32 %v707, 7
    %v709 = vsub.s32 3, %v708
    %v710 = vrot.slane %v689, %v709
    %v711 = vlaneseq
    %v712 = vshrl.u32 %v711, 7
    %v713 = vsub.s32 4, %v712
    %v714 = vrot.slane %v689, %v713
    %v715 = vlaneseq
    %v716 = vshrl.u32 %v715, 7
    %v717 = vsub.s32 5, %v716
    %v718 = vrot.slane %v689, %v717
    %v719 = vlaneseq
    %v720 = vshrl.u32 %v719, 7
    %v721 = vsub.s32 6, %v720
    %v722 = vrot.slane %v689, %v721
    %v730 = vadd.f32 %v679, %v698
    %v731 = vadd.f32 %v680, %v702
    %v732 = vadd.f32 %v681, %v706
    %v733 = vadd.f32 %v682, %v710
    %v734 = vadd.f32 %v683, %v714
    %v735 = vadd.f32 %v684, %v718
    %v736 = vadd.f32 %v685, %v722
    %v737 = vmax.f32 %v730, %v734
    %v738 = vmax.f32 %v731, %v735
    %v739 = vmax.f32 %v732, %v736
    %v740 = vmax.f32 %v737, %v738
    %v741 = vmax.f32 %v739, %v733
    %v742 = vmax.f32 %v740, %v741
    %743 = vmax.xlane.f32.xlu0 %v742
    %v744 = vpop.xlane.xlu0 %743
    %v746 = vlaneseq
    %v747 = vshrl.u32 %v746, 7
    %v748 = vsub.s32 0, %v747
    %v749 = vrot.slane %v693, %v748
    %v750 = vlaneseq
    %v751 = vshrl.u32 %v750, 7
    %v752 = vsub.s32 1, %v751
    %v753 = vrot.slane %v693, %v752
    %v754 = vlaneseq
    %v755 = vshrl.u32 %v754, 7
    %v756 = vsub.s32 2, %v755
    %v757 = vrot.slane %v693, %v756
    %v758 = vlaneseq
    %v759 = vshrl.u32 %v758, 7
    %v760 = vsub.s32 3, %v759
    %v761 = vrot.slane %v693, %v760
    %v762 = vlaneseq
    %v763 = vshrl.u32 %v762, 7
    %v764 = vsub.s32 4, %v763
    %v765 = vrot.slane %v693, %v764
    %v766 = vlaneseq
    %v767 = vshrl.u32 %v766, 7
    %v768 = vsub.s32 5, %v767
    %v769 = vrot.slane %v693, %v768
    %v770 = vlaneseq
    %v771 = vshrl.u32 %v770, 7
    %v772 = vsub.s32 6, %v771
    %v773 = vrot.slane %v693, %v772
    %v781 = vsub.f32 %v679, %v749
    %v782 = vsub.f32 %v680, %v753
    %v783 = vsub.f32 %v681, %v757
    %v784 = vsub.f32 %v682, %v761
    %v785 = vsub.f32 %v683, %v765
    %v786 = vsub.f32 %v684, %v769
    %v787 = vsub.f32 %v685, %v773
    %v788 = vmin.f32 %v781, %v785
    %v789 = vmin.f32 %v782, %v786
    %v790 = vmin.f32 %v783, %v787
    %v791 = vmin.f32 %v788, %v789
    %v792 = vmin.f32 %v790, %v784
    %v793 = vmin.f32 %v791, %v792
    %794 = vmin.xlane.f32.xlu0 %v793
    %v795 = vpop.xlane.xlu0 %794
    %v796 = vsub.f32 %v744, %v795
    %vm797 = vcmask 48168
    %798 = vst.msk [vmem:[#allocation8] sm:$0xff] %vm797, %v796
    %vm799 = vcmask 130168
    %800 = vst.msk [vmem:[#allocation8] sm:$0xff] %vm799, %v744
    %vm801 = vcmask 212168
    %802 = vst.msk [vmem:[#allocation8] sm:$0xff] %vm801, %v795
    %v803 = vld [vmem:[#allocation2] sm:$0xff]
    %v804 = vld [vmem:[#allocation2 + $0x8] sm:$0xff]
    %v805 = vld [vmem:[#allocation2 + $0x10] sm:$0xff]
    %v806 = vld [vmem:[#allocation2 + $0x18] sm:$0xff]
    %v807 = vld [vmem:[#allocation2 + $0x20] sm:$0xff]
    %v808 = vld [vmem:[#allocation2 + $0x28] sm:$0xff]
    %v809 = vld [vmem:[#allocation2 + $0x30] sm:$0xff]
    %s810 = scalar_lea.vmem [#allocation5], 6
    %v811 = vld [vmem:[%s810] ss:$8 sm:$0xf]
    %v812 = vld [vmem:[%s810] ss:$8 sm:$0xf0]
    %v813 = vor.u32 %v811, %v812
    %s814 = scalar_lea.vmem [#allocation7], 6
    %v815 = vld [vmem:[%s814] ss:$8 sm:$0xf]
    %v816 = vld [vmem:[%s814] ss:$8 sm:$0xf0]
    %v817 = vor.u32 %v815, %v816
    %v819 = vlaneseq
    %v820 = vshrl.u32 %v819, 7
    %v821 = vsub.s32 0, %v820
    %v822 = vrot.slane %v813, %v821
    %v823 = vlaneseq
    %v824 = vshrl.u32 %v823, 7
    %v825 = vsub.s32 1, %v824
    %v826 = vrot.slane %v813, %v825
    %v827 = vlaneseq
    %v828 = vshrl.u32 %v827, 7
    %v829 = vsub.s32 2, %v828
    %v830 = vrot.slane %v813, %v829
    %v831 = vlaneseq
    %v832 = vshrl.u32 %v831, 7
    %v833 = vsub.s32 3, %v832
    %v834 = vrot.slane %v813, %v833
    %v835 = vlaneseq
    %v836 = vshrl.u32 %v835, 7
    %v837 = vsub.s32 4, %v836
    %v838 = vrot.slane %v813, %v837
    %v839 = vlaneseq
    %v840 = vshrl.u32 %v839, 7
    %v841 = vsub.s32 5, %v840
    %v842 = vrot.slane %v813, %v841
    %v843 = vlaneseq
    %v844 = vshrl.u32 %v843, 7
    %v845 = vsub.s32 6, %v844
    %v846 = vrot.slane %v813, %v845
    %v854 = vadd.f32 %v803, %v822
    %v855 = vadd.f32 %v804, %v826
    %v856 = vadd.f32 %v805, %v830
    %v857 = vadd.f32 %v806, %v834
    %v858 = vadd.f32 %v807, %v838
    %v859 = vadd.f32 %v808, %v842
    %v860 = vadd.f32 %v809, %v846
    %v861 = vmax.f32 %v854, %v858
    %v862 = vmax.f32 %v855, %v859
    %v863 = vmax.f32 %v856, %v860
    %v864 = vmax.f32 %v861, %v862
    %v865 = vmax.f32 %v863, %v857
    %v866 = vmax.f32 %v864, %v865
    %867 = vmax.xlane.f32.xlu0 %v866
    %v868 = vpop.xlane.xlu0 %867
    %v870 = vlaneseq
    %v871 = vshrl.u32 %v870, 7
    %v872 = vsub.s32 0, %v871
    %v873 = vrot.slane %v817, %v872
    %v874 = vlaneseq
    %v875 = vshrl.u32 %v874, 7
    %v876 = vsub.s32 1, %v875
    %v877 = vrot.slane %v817, %v876
    %v878 = vlaneseq
    %v879 = vshrl.u32 %v878, 7
    %v880 = vsub.s32 2, %v879
    %v881 = vrot.slane %v817, %v880
    %v882 = vlaneseq
    %v883 = vshrl.u32 %v882, 7
    %v884 = vsub.s32 3, %v883
    %v885 = vrot.slane %v817, %v884
    %v886 = vlaneseq
    %v887 = vshrl.u32 %v886, 7
    %v888 = vsub.s32 4, %v887
    %v889 = vrot.slane %v817, %v888
    %v890 = vlaneseq
    %v891 = vshrl.u32 %v890, 7
    %v892 = vsub.s32 5, %v891
    %v893 = vrot.slane %v817, %v892
    %v894 = vlaneseq
    %v895 = vshrl.u32 %v894, 7
    %v896 = vsub.s32 6, %v895
    %v897 = vrot.slane %v817, %v896
    %v905 = vsub.f32 %v803, %v873
    %v906 = vsub.f32 %v804, %v877
    %v907 = vsub.f32 %v805, %v881
    %v908 = vsub.f32 %v806, %v885
    %v909 = vsub.f32 %v807, %v889
    %v910 = vsub.f32 %v808, %v893
    %v911 = vsub.f32 %v809, %v897
    %v912 = vmin.f32 %v905, %v909
    %v913 = vmin.f32 %v906, %v910
    %v914 = vmin.f32 %v907, %v911
    %v915 = vmin.f32 %v912, %v913
    %v916 = vmin.f32 %v914, %v908
    %v917 = vmin.f32 %v915, %v916
    %918 = vmin.xlane.f32.xlu0 %v917
    %v919 = vpop.xlane.xlu0 %918
    %v920 = vsub.f32 %v868, %v919
    %vm921 = vcmask 56368
    %922 = vst.msk [vmem:[#allocation8] sm:$0xff] %vm921, %v920
    %vm923 = vcmask 138368
    %924 = vst.msk [vmem:[#allocation8] sm:$0xff] %vm923, %v868
    %vm925 = vcmask 220368
    %926 = vst.msk [vmem:[#allocation8] sm:$0xff] %vm925, %v919
    %v927 = vld [vmem:[#allocation2] sm:$0xff]
    %v928 = vld [vmem:[#allocation2 + $0x8] sm:$0xff]
    %v929 = vld [vmem:[#allocation2 + $0x10] sm:$0xff]
    %v930 = vld [vmem:[#allocation2 + $0x18] sm:$0xff]
    %v931 = vld [vmem:[#allocation2 + $0x20] sm:$0xff]
    %v932 = vld [vmem:[#allocation2 + $0x28] sm:$0xff]
    %v933 = vld [vmem:[#allocation2 + $0x30] sm:$0xff]
    %s934 = scalar_lea.vmem [#allocation5], 7
    %v935 = vld [vmem:[%s934] ss:$8 sm:$0xf]
    %v936 = vld [vmem:[%s934] ss:$8 sm:$0xf0]
    %v937 = vor.u32 %v935, %v936
    %s938 = scalar_lea.vmem [#allocation7], 7
    %v939 = vld [vmem:[%s938] ss:$8 sm:$0xf]
    %v940 = vld [vmem:[%s938] ss:$8 sm:$0xf0]
    %v941 = vor.u32 %v939, %v940
    %v943 = vlaneseq
    %v944 = vshrl.u32 %v943, 7
    %v945 = vsub.s32 0, %v944
    %v946 = vrot.slane %v937, %v945
    %v947 = vlaneseq
    %v948 = vshrl.u32 %v947, 7
    %v949 = vsub.s32 1, %v948
    %v950 = vrot.slane %v937, %v949
    %v951 = vlaneseq
    %v952 = vshrl.u32 %v951, 7
    %v953 = vsub.s32 2, %v952
    %v954 = vrot.slane %v937, %v953
    %v955 = vlaneseq
    %v956 = vshrl.u32 %v955, 7
    %v957 = vsub.s32 3, %v956
    %v958 = vrot.slane %v937, %v957
    %v959 = vlaneseq
    %v960 = vshrl.u32 %v959, 7
    %v961 = vsub.s32 4, %v960
    %v962 = vrot.slane %v937, %v961
    %v963 = vlaneseq
    %v964 = vshrl.u32 %v963, 7
    %v965 = vsub.s32 5, %v964
    %v966 = vrot.slane %v937, %v965
    %v967 = vlaneseq
    %v968 = vshrl.u32 %v967, 7
    %v969 = vsub.s32 6, %v968
    %v970 = vrot.slane %v937, %v969
    %v978 = vadd.f32 %v927, %v946
    %v979 = vadd.f32 %v928, %v950
    %v980 = vadd.f32 %v929, %v954
    %v981 = vadd.f32 %v930, %v958
    %v982 = vadd.f32 %v931, %v962
    %v983 = vadd.f32 %v932, %v966
    %v984 = vadd.f32 %v933, %v970
    %v985 = vmax.f32 %v978, %v982
    %v986 = vmax.f32 %v979, %v983
    %v987 = vmax.f32 %v980, %v984
    %v988 = vmax.f32 %v985, %v986
    %v989 = vmax.f32 %v987, %v981
    %v990 = vmax.f32 %v988, %v989
    %991 = vmax.xlane.f32.xlu0 %v990
    %v992 = vpop.xlane.xlu0 %991
    %v994 = vlaneseq
    %v995 = vshrl.u32 %v994, 7
    %v996 = vsub.s32 0, %v995
    %v997 = vrot.slane %v941, %v996
    %v998 = vlaneseq
    %v999 = vshrl.u32 %v998, 7
    %v1000 = vsub.s32 1, %v999
    %v1001 = vrot.slane %v941, %v1000
    %v1002 = vlaneseq
    %v1003 = vshrl.u32 %v1002, 7
    %v1004 = vsub.s32 2, %v1003
    %v1005 = vrot.slane %v941, %v1004
    %v1006 = vlaneseq
    %v1007 = vshrl.u32 %v1006, 7
    %v1008 = vsub.s32 3, %v1007
    %v1009 = vrot.slane %v941, %v1008
    %v1010 = vlaneseq
    %v1011 = vshrl.u32 %v1010, 7
    %v1012 = vsub.s32 4, %v1011
    %v1013 = vrot.slane %v941, %v1012
    %v1014 = vlaneseq
    %v1015 = vshrl.u32 %v1014, 7
    %v1016 = vsub.s32 5, %v1015
    %v1017 = vrot.slane %v941, %v1016
    %v1018 = vlaneseq
    %v1019 = vshrl.u32 %v1018, 7
    %v1020 = vsub.s32 6, %v1019
    %v1021 = vrot.slane %v941, %v1020
    %v1029 = vsub.f32 %v927, %v997
    %v1030 = vsub.f32 %v928, %v1001
    %v1031 = vsub.f32 %v929, %v1005
    %v1032 = vsub.f32 %v930, %v1009
    %v1033 = vsub.f32 %v931, %v1013
    %v1034 = vsub.f32 %v932, %v1017
    %v1035 = vsub.f32 %v933, %v1021
    %v1036 = vmin.f32 %v1029, %v1033
    %v1037 = vmin.f32 %v1030, %v1034
    %v1038 = vmin.f32 %v1031, %v1035
    %v1039 = vmin.f32 %v1036, %v1037
    %v1040 = vmin.f32 %v1038, %v1032
    %v1041 = vmin.f32 %v1039, %v1040
    %1042 = vmin.xlane.f32.xlu0 %v1041
    %v1043 = vpop.xlane.xlu0 %1042
    %v1044 = vsub.f32 %v992, %v1043
    %vm1045 = vcmask 64568
    %1046 = vst.msk [vmem:[#allocation8] sm:$0xff] %vm1045, %v1044
    %vm1047 = vcmask 146568
    %1048 = vst.msk [vmem:[#allocation8] sm:$0xff] %vm1047, %v992
    %vm1049 = vcmask 228568
    %1050 = vst.msk [vmem:[#allocation8] sm:$0xff] %vm1049, %v1043
    %v1051 = vld [vmem:[#allocation2] sm:$0xff]
    %v1052 = vld [vmem:[#allocation2 + $0x8] sm:$0xff]
    %v1053 = vld [vmem:[#allocation2 + $0x10] sm:$0xff]
    %v1054 = vld [vmem:[#allocation2 + $0x18] sm:$0xff]
    %v1055 = vld [vmem:[#allocation2 + $0x20] sm:$0xff]
    %v1056 = vld [vmem:[#allocation2 + $0x28] sm:$0xff]
    %v1057 = vld [vmem:[#allocation2 + $0x30] sm:$0xff]
    %s1058 = scalar_lea.vmem [#allocation5], 56
    %v1059 = vld [vmem:[%s1058] ss:$8 sm:$0xf]
    %v1060 = vld [vmem:[%s1058] ss:$8 sm:$0xf0]
    %v1061 = vor.u32 %v1059, %v1060
    %s1062 = scalar_lea.vmem [#allocation7], 56
    %v1063 = vld [vmem:[%s1062] ss:$8 sm:$0xf]
    %v1064 = vld [vmem:[%s1062] ss:$8 sm:$0xf0]
    %v1065 = vor.u32 %v1063, %v1064
    %v1067 = vlaneseq
    %v1068 = vshrl.u32 %v1067, 7
    %v1069 = vsub.s32 0, %v1068
    %v1070 = vrot.slane %v1061, %v1069
    %v1071 = vlaneseq
    %v1072 = vshrl.u32 %v1071, 7
    %v1073 = vsub.s32 1, %v1072
    %v1074 = vrot.slane %v1061, %v1073
    %v1075 = vlaneseq
    %v1076 = vshrl.u32 %v1075, 7
    %v1077 = vsub.s32 2, %v1076
    %v1078 = vrot.slane %v1061, %v1077
    %v1079 = vlaneseq
    %v1080 = vshrl.u32 %v1079, 7
    %v1081 = vsub.s32 3, %v1080
    %v1082 = vrot.slane %v1061, %v1081
    %v1083 = vlaneseq
    %v1084 = vshrl.u32 %v1083, 7
    %v1085 = vsub.s32 4, %v1084
    %v1086 = vrot.slane %v1061, %v1085
    %v1087 = vlaneseq
    %v1088 = vshrl.u32 %v1087, 7
    %v1089 = vsub.s32 5, %v1088
    %v1090 = vrot.slane %v1061, %v1089
    %v1091 = vlaneseq
    %v1092 = vshrl.u32 %v1091, 7
    %v1093 = vsub.s32 6, %v1092
    %v1094 = vrot.slane %v1061, %v1093
    %v1102 = vadd.f32 %v1051, %v1070
    %v1103 = vadd.f32 %v1052, %v1074
    %v1104 = vadd.f32 %v1053, %v1078
    %v1105 = vadd.f32 %v1054, %v1082
    %v1106 = vadd.f32 %v1055, %v1086
    %v1107 = vadd.f32 %v1056, %v1090
    %v1108 = vadd.f32 %v1057, %v1094
    %v1109 = vmax.f32 %v1102, %v1106
    %v1110 = vmax.f32 %v1103, %v1107
    %v1111 = vmax.f32 %v1104, %v1108
    %v1112 = vmax.f32 %v1109, %v1110
    %v1113 = vmax.f32 %v1111, %v1105
    %v1114 = vmax.f32 %v1112, %v1113
    %1115 = vmax.xlane.f32.xlu0 %v1114
    %v1116 = vpop.xlane.xlu0 %1115
    %v1118 = vlaneseq
    %v1119 = vshrl.u32 %v1118, 7
    %v1120 = vsub.s32 0, %v1119
    %v1121 = vrot.slane %v1065, %v1120
    %v1122 = vlaneseq
    %v1123 = vshrl.u32 %v1122, 7
    %v1124 = vsub.s32 1, %v1123
    %v1125 = vrot.slane %v1065, %v1124
    %v1126 = vlaneseq
    %v1127 = vshrl.u32 %v1126, 7
    %v1128 = vsub.s32 2, %v1127
    %v1129 = vrot.slane %v1065, %v1128
    %v1130 = vlaneseq
    %v1131 = vshrl.u32 %v1130, 7
    %v1132 = vsub.s32 3, %v1131
    %v1133 = vrot.slane %v1065, %v1132
    %v1134 = vlaneseq
    %v1135 = vshrl.u32 %v1134, 7
    %v1136 = vsub.s32 4, %v1135
    %v1137 = vrot.slane %v1065, %v1136
    %v1138 = vlaneseq
    %v1139 = vshrl.u32 %v1138, 7
    %v1140 = vsub.s32 5, %v1139
    %v1141 = vrot.slane %v1065, %v1140
    %v1142 = vlaneseq
    %v1143 = vshrl.u32 %v1142, 7
    %v1144 = vsub.s32 6, %v1143
    %v1145 = vrot.slane %v1065, %v1144
    %v1153 = vsub.f32 %v1051, %v1121
    %v1154 = vsub.f32 %v1052, %v1125
    %v1155 = vsub.f32 %v1053, %v1129
    %v1156 = vsub.f32 %v1054, %v1133
    %v1157 = vsub.f32 %v1055, %v1137
    %v1158 = vsub.f32 %v1056, %v1141
    %v1159 = vsub.f32 %v1057, %v1145
    %v1160 = vmin.f32 %v1153, %v1157
    %v1161 = vmin.f32 %v1154, %v1158
    %v1162 = vmin.f32 %v1155, %v1159
    %v1163 = vmin.f32 %v1160, %v1161
    %v1164 = vmin.f32 %v1162, %v1156
    %v1165 = vmin.f32 %v1163, %v1164
    %1166 = vmin.xlane.f32.xlu0 %v1165
    %v1167 = vpop.xlane.xlu0 %1166
    %v1168 = vsub.f32 %v1116, %v1167
    %vm1169 = vcmask 72768
    %1170 = vst.msk [vmem:[#allocation8] sm:$0xff] %vm1169, %v1168
    %vm1171 = vcmask 154768
    %1172 = vst.msk [vmem:[#allocation8] sm:$0xff] %vm1171, %v1116
    %vm1173 = vcmask 236768
    %1174 = vst.msk [vmem:[#allocation8] sm:$0xff] %vm1173, %v1167
    %v1175 = vld [vmem:[#allocation2] sm:$0xff]
    %v1176 = vld [vmem:[#allocation2 + $0x8] sm:$0xff]
    %v1177 = vld [vmem:[#allocation2 + $0x10] sm:$0xff]
    %v1178 = vld [vmem:[#allocation2 + $0x18] sm:$0xff]
    %v1179 = vld [vmem:[#allocation2 + $0x20] sm:$0xff]
    %v1180 = vld [vmem:[#allocation2 + $0x28] sm:$0xff]
    %v1181 = vld [vmem:[#allocation2 + $0x30] sm:$0xff]
    %s1182 = scalar_lea.vmem [#allocation5], 57
    %v1183 = vld [vmem:[%s1182] ss:$8 sm:$0xf]
    %v1184 = vld [vmem:[%s1182] ss:$8 sm:$0xf0]
    %v1185 = vor.u32 %v1183, %v1184
    %s1186 = scalar_lea.vmem [#allocation7], 57
    %v1187 = vld [vmem:[%s1186] ss:$8 sm:$0xf]
    %v1188 = vld [vmem:[%s1186] ss:$8 sm:$0xf0]
    %v1189 = vor.u32 %v1187, %v1188
    %v1191 = vlaneseq
    %v1192 = vshrl.u32 %v1191, 7
    %v1193 = vsub.s32 0, %v1192
    %v1194 = vrot.slane %v1185, %v1193
    %v1195 = vlaneseq
    %v1196 = vshrl.u32 %v1195, 7
    %v1197 = vsub.s32 1, %v1196
    %v1198 = vrot.slane %v1185, %v1197
    %v1199 = vlaneseq
    %v1200 = vshrl.u32 %v1199, 7
    %v1201 = vsub.s32 2, %v1200
    %v1202 = vrot.slane %v1185, %v1201
    %v1203 = vlaneseq
    %v1204 = vshrl.u32 %v1203, 7
    %v1205 = vsub.s32 3, %v1204
    %v1206 = vrot.slane %v1185, %v1205
    %v1207 = vlaneseq
    %v1208 = vshrl.u32 %v1207, 7
    %v1209 = vsub.s32 4, %v1208
    %v1210 = vrot.slane %v1185, %v1209
    %v1211 = vlaneseq
    %v1212 = vshrl.u32 %v1211, 7
    %v1213 = vsub.s32 5, %v1212
    %v1214 = vrot.slane %v1185, %v1213
    %v1215 = vlaneseq
    %v1216 = vshrl.u32 %v1215, 7
    %v1217 = vsub.s32 6, %v1216
    %v1218 = vrot.slane %v1185, %v1217
    %v1226 = vadd.f32 %v1175, %v1194
    %v1227 = vadd.f32 %v1176, %v1198
    %v1228 = vadd.f32 %v1177, %v1202
    %v1229 = vadd.f32 %v1178, %v1206
    %v1230 = vadd.f32 %v1179, %v1210
    %v1231 = vadd.f32 %v1180, %v1214
    %v1232 = vadd.f32 %v1181, %v1218
    %v1233 = vmax.f32 %v1226, %v1230
    %v1234 = vmax.f32 %v1227, %v1231
    %v1235 = vmax.f32 %v1228, %v1232
    %v1236 = vmax.f32 %v1233, %v1234
    %v1237 = vmax.f32 %v1235, %v1229
    %v1238 = vmax.f32 %v1236, %v1237
    %1239 = vmax.xlane.f32.xlu0 %v1238
    %v1240 = vpop.xlane.xlu0 %1239
    %v1242 = vlaneseq
    %v1243 = vshrl.u32 %v1242, 7
    %v1244 = vsub.s32 0, %v1243
    %v1245 = vrot.slane %v1189, %v1244
    %v1246 = vlaneseq
    %v1247 = vshrl.u32 %v1246, 7
    %v1248 = vsub.s32 1, %v1247
    %v1249 = vrot.slane %v1189, %v1248
    %v1250 = vlaneseq
    %v1251 = vshrl.u32 %v1250, 7
    %v1252 = vsub.s32 2, %v1251
    %v1253 = vrot.slane %v1189, %v1252
    %v1254 = vlaneseq
    %v1255 = vshrl.u32 %v1254, 7
    %v1256 = vsub.s32 3, %v1255
    %v1257 = vrot.slane %v1189, %v1256
    %v1258 = vlaneseq
    %v1259 = vshrl.u32 %v1258, 7
    %v1260 = vsub.s32 4, %v1259
    %v1261 = vrot.slane %v1189, %v1260
    %v1262 = vlaneseq
    %v1263 = vshrl.u32 %v1262, 7
    %v1264 = vsub.s32 5, %v1263
    %v1265 = vrot.slane %v1189, %v1264
    %v1266 = vlaneseq
    %v1267 = vshrl.u32 %v1266, 7
    %v1268 = vsub.s32 6, %v1267
    %v1269 = vrot.slane %v1189, %v1268
    %v1277 = vsub.f32 %v1175, %v1245
    %v1278 = vsub.f32 %v1176, %v1249
    %v1279 = vsub.f32 %v1177, %v1253
    %v1280 = vsub.f32 %v1178, %v1257
    %v1281 = vsub.f32 %v1179, %v1261
    %v1282 = vsub.f32 %v1180, %v1265
    %v1283 = vsub.f32 %v1181, %v1269
    %v1284 = vmin.f32 %v1277, %v1281
    %v1285 = vmin.f32 %v1278, %v1282
    %v1286 = vmin.f32 %v1279, %v1283
    %v1287 = vmin.f32 %v1284, %v1285
    %v1288 = vmin.f32 %v1286, %v1280
    %v1289 = vmin.f32 %v1287, %v1288
    %1290 = vmin.xlane.f32.xlu0 %v1289
    %v1291 = vpop.xlane.xlu0 %1290
    %v1292 = vsub.f32 %v1240, %v1291
    %vm1293 = vcmask 80968
    %1294 = vst.msk [vmem:[#allocation8] sm:$0xff] %vm1293, %v1292
    %vm1295 = vcmask 162968
    %1296 = vst.msk [vmem:[#allocation8] sm:$0xff] %vm1295, %v1240
    %vm1297 = vcmask 244968
    %1298 = vst.msk [vmem:[#allocation8] sm:$0xff] %vm1297, %v1291
    %v1299 = vsel %vm177, %v176, %v300
    %vm1300 = vcmask 15360
    %v1301 = vsel %vm1300, %v1299, %v424
    %vm1302 = vcmask 23552
    %v1303 = vsel %vm1302, %v1301, %v548
    %vm1304 = vcmask 31744
    %v1305 = vsel %vm1304, %v1303, %v672
    %vm1306 = vcmask 39936
    %v1307 = vsel %vm1306, %v1305, %v796
    %vm1308 = vcmask 48128
    %v1309 = vsel %vm1308, %v1307, %v920
    %vm1310 = vcmask 56320
    %v1311 = vsel %vm1310, %v1309, %v1044
    %vm1312 = vcmask 64512
    %v1313 = vsel %vm1312, %v1311, %v1168
    %vm1314 = vcmask 72704
    %v1315 = vsel %vm1314, %v1313, %v1292
    %vm1316 = vcmp.gt.f32.partialorder %v1315, 0.0
    %v1317 = vmul.f32 %v1315, 0.01
    %v1318 = vsel %vm1316, %v1315, %v1317
    %v1319 = vld [vmem:[%s3] sm:$0x1]
    %v1320 = vlaneseq
    %v1321 = vshrl.u32 %v1320, 7
    %v1322 = vsub.s32 0, %v1321
    %v1323 = vrot.slane %v1319, %v1322
    %v1324 = vmul.f32 %v1318, %v1323
    %vm1325 = vcmask 80896
    %v1326 = vsel %vm1325, %v1324, 0.0
    %1327 = vadd.xlane.f32.xlu0 %v1326
    %v1328 = vpop.xlane.xlu0 %1327
    %v1329 = vld [vmem:[%s3 + $0x1] sm:$0x1]
    %v1330 = vlaneseq
    %v1331 = vshrl.u32 %v1330, 7
    %v1332 = vsub.s32 0, %v1331
    %v1333 = vrot.slane %v1329, %v1332
    %v1334 = vmul.f32 %v1318, %v1333
    %v1335 = vsel %vm1325, %v1334, 0.0
    %1336 = vadd.xlane.f32.xlu0 %v1335
    %v1337 = vpop.xlane.xlu0 %1336
    %v1338 = vsel %vm177, %v1328, %v1337
    %v1339 = vld [vmem:[%s4] sm:$0x1]
    %v1341 = vlaneseq
    %v1342 = vshrl.u32 %v1341, 7
    %v1343 = vsub.s32 0, %v1342
    %v1344 = vrot.slane %v1339, %v1343
    %v1346 = vadd.f32 %v1338, %v1344
    %v1347 = vsel %vm1300, %v1346, -inf
    %1348 = vmax.xlane.f32.xlu0 %v1347
    %v1349 = vpop.xlane.xlu0 %1348
    %v1350 = vsub.f32 %v1346, %v1349
    %v1351 = vmul.f32 %v1350, 1.442695
    %v1352 = vpow.pop %v1351
    %v1353 = vsel %vm1300, %v1352, 0.0
    %1354 = vadd.xlane.f32.xlu0 %v1353
    %v1355 = vpop.xlane.xlu0 %1354
    %v1356 = vlog2.pop %v1355
    %v1357 = vmul.f32 %v1356, 0.6931472
    %v1358 = vsub.f32 %v1350, %v1357
    %1360 = vrot.lane.b32.xlu0 %v1358, 30
    %v1361 = vpop.permute.xlu0 %1360
    %vm1363 = vcmask 261360
    %1364 = vst.msk [vmem:[#allocation8] sm:$0xff] %vm1363, %v1361
    // Predicated region
    $region34: #{tpu_custom_call.1} parent=1 // pred_check
      _
    $region35: #{tpu_custom_call.1} parent=1 // pred_check_branch
      %1366 = sbr.rel (0) target = $region37
    $region36: #{tpu_custom_call.1} parent=1 // pred_region
      %s1368 = ssub.s32 128, 128
      %1369 = vsyncadd [#allocation4], %s1368
      %s1371 = sshll.u32 [#allocation8], 4
      %s1372 = int_to_ptr.vmem [resolvable:$true] %s1371
      %1374 = dma.vmem_to_hbm [thread:$0]  %s1372, 128, %s5, [#allocation4]
    $region37: #{tpu_custom_call.1} parent=1 // pred_fallthru
      _
    // Predicated region
    $region38: #{tpu_custom_call.1} parent=1 // pred_check
      _
    $region39: #{tpu_custom_call.1} parent=1 // pred_check_branch
      %1376 = sbr.rel (0) target = $region41
    $region40: #{tpu_custom_call.1} parent=1 // pred_region
      %1377 = dma.done [#allocation4], 128
    $region41: #{tpu_custom_call.1} parent=1 // pred_fallthru
      _
    %1378 = vsyncpa [#allocation3], 1
    %1379 = vsyncpa [#allocation6], 1
    %1380 = vsyncpa [#allocation4], 1

</llo_original>
